<compile_context>
chip_gen: v7x
topology: tpu7x:2x2x1
jax: 0.10.0
libtpu: 0.0.40
codegen_flags: <defaults>
</compile_context>

<pallas_src>
import functools

import jax
import jax.numpy as jnp
from jax.experimental import pallas as pl
from jax.experimental.pallas import tpu as pltpu


def _round_up(n: int, m: int) -> int:
    return ((n + m - 1) // m) * m


def _choose_tile(B: int, tb_max: int = 512) -> int:
    """Pick a batch tile (multiple of 8).

    - Small batches (<= 256 rows): single grid step (overhead dominates).
    - Larger batches: aim for >= 2 grid steps so both v7x TensorCores get
      work, while keeping tiles large (256..tb_max rows) so the ~0.35us
      per-step overhead is amortized on single-TC v5e/v6e.
    """
    if B <= 256:
        return _round_up(B, 8)
    tb = min(tb_max, _round_up(pl.cdiv(B, 2), 8))
    return max(256, _round_up(tb, 8))


def autoencoder_kernel(x_ref, we_ref, be_ref, wd_ref, bd_ref, o_ref):
    # encoder: x @ W_e^T + b_e   (W_e passed pre-transposed: [D, H])
    x = x_ref[...].astype(we_ref.dtype)
    h = jnp.dot(x, we_ref[...], preferred_element_type=jnp.float32)
    h = jnp.maximum(h + be_ref[...], 0.0)          # bias + ReLU in f32
    # decoder: h @ W_d^T + b_d   (W_d passed pre-transposed: [H, D])
    y = jnp.dot(h.astype(wd_ref.dtype), wd_ref[...],
                preferred_element_type=jnp.float32)
    o_ref[...] = (y + bd_ref[...]).astype(o_ref.dtype)


def prepare_params(w_enc, b_enc, w_dec, b_dec, weight_dtype=jnp.float32):
    """One-time parameter layout prep (hoisted out of the per-call hot path).

    PyTorch nn.Linear convention in: w_enc [H, D], b_enc [H], w_dec [D, H],
    b_dec [D].  Out: [D, H] / [H, D] weights (f32 by default for exact Linear
    semantics; pass bf16 only if D/H grow enough for weight DMA to matter)
    and f32 [1, H] / [1, D] biases.
    """
    we_t = jnp.asarray(w_enc).astype(weight_dtype).T      # [D, H]
    wd_t = jnp.asarray(w_dec).astype(weight_dtype).T      # [H, D]
    be = jnp.asarray(b_enc, jnp.float32).reshape(1, -1)   # [1, H]
    bd = jnp.asarray(b_dec, jnp.float32).reshape(1, -1)   # [1, D]
    return we_t, be, wd_t, bd


@functools.partial(jax.jit, static_argnames=("tb",))
def numerical_autoencoder(x, we_t, be, wd_t, bd, *, tb=None):
    """x: [B, D]; params from prepare_params(). Returns [B, D] in x.dtype.

    tb: optional batch tile override (rows per grid step, multiple of 8).
    """
    B, D = x.shape
    H = we_t.shape[1]

    if tb is None:
        tb = _choose_tile(B)
    tb = _round_up(max(8, min(tb, _round_up(B, 8))), 8)

    grid = (pl.cdiv(B, tb),)   # ragged last tile handled by partial writeback

    bytes_per_x = jnp.dtype(x.dtype).itemsize
    bytes_per_w = jnp.dtype(we_t.dtype).itemsize
    cost = pl.CostEstimate(
        flops=4 * B * D * H,            # two matmuls
        transcendentals=0,
        bytes_accessed=(B * D * bytes_per_x) * 2        # x in + y out
        + (D * H * bytes_per_w) * 2                     # both weights
        + (H + D) * 4,                                  # biases
    )

    return pl.pallas_call(
        autoencoder_kernel,
        out_shape=jax.ShapeDtypeStruct((B, D), x.dtype),
        grid_spec=pltpu.PrefetchScalarGridSpec(
            num_scalar_prefetch=0,
            grid=grid,
            in_specs=[
                pl.BlockSpec((tb, D), lambda i: (i, 0)),   # x tile (streams)
                pl.BlockSpec((D, H), lambda i: (0, 0)),    # encoder W (resident)
                pl.BlockSpec((1, H), lambda i: (0, 0)),    # encoder bias
                pl.BlockSpec((H, D), lambda i: (0, 0)),    # decoder W (resident)
                pl.BlockSpec((1, D), lambda i: (0, 0)),    # decoder bias
            ],
            out_specs=pl.BlockSpec((tb, D), lambda i: (i, 0)),
        ),
        compiler_params=pltpu.CompilerParams(
            dimension_semantics=("parallel",)),
        cost_estimate=cost,
    )(x, we_t, be, wd_t, bd)


if __name__ == "__main__":
    # Small shapes consistent with the module's forward: x is [batch, input_dim].
    # B=1000 is deliberately NOT a multiple of the tile to exercise the
    # pad-free ragged-tail path; the chosen tile (504) gives a 2-step
    # "parallel" grid so both v7x TensorCores are active.
    B, INPUT_DIM, HIDDEN_DIM = 1000, 256, 128

    key = jax.random.PRNGKey(0)
    kx, kwe, kbe, kwd, kbd = jax.random.split(key, 5)

    x = jax.random.normal(kx, (B, INPUT_DIM), dtype=jnp.float32)

    # Deterministic parameter init (uniform, like PyTorch Linear default scale).
    bound_e = 1.0 / (INPUT_DIM ** 0.5)
    bound_d = 1.0 / (HIDDEN_DIM ** 0.5)
    w_enc = jax.random.uniform(kwe, (HIDDEN_DIM, INPUT_DIM), jnp.float32,
                               -bound_e, bound_e)
    b_enc = jax.random.uniform(kbe, (HIDDEN_DIM,), jnp.float32,
                               -bound_e, bound_e)
    w_dec = jax.random.uniform(kwd, (INPUT_DIM, HIDDEN_DIM), jnp.float32,
                               -bound_d, bound_d)
    b_dec = jax.random.uniform(kbd, (INPUT_DIM,), jnp.float32,
                               -bound_d, bound_d)

    # One-time parameter prep (transpose hoisted out of the hot path; f32
    # weights keep PyTorch f32 Linear semantics -- kernel is HBM-bound, so
    # bf16 weights would buy ~nothing at these shapes).
    we_t, be, wd_t, bd = prepare_params(w_enc, b_enc, w_dec, b_dec)

    out = numerical_autoencoder(x, we_t, be, wd_t, bd)
    out = jax.block_until_ready(out)

    # Pure-JAX f32 reference of the forward semantics. f32 matmul path is
    # typically within ~1e-4; tolerance kept generous for MXU precision modes.
    h_ref = jnp.maximum(x @ w_enc.T + b_enc, 0.0)
    y_ref = h_ref @ w_dec.T + b_dec
    assert out.shape == (B, INPUT_DIM)
    assert jnp.allclose(out, y_ref, atol=2e-2, rtol=2e-2), (
        float(jnp.max(jnp.abs(out - y_ref))))

    print("KERNEL_OK")
</pallas_src>

<mosaic_0001>
module attributes {stable_mosaic.version = 11 : i64} {
  func.func @autoencoder_kernel(%arg0: i32, %arg1: memref<504x256xf32, #tpu.memory_space<vmem>>, %arg2: memref<256x128xf32, #tpu.memory_space<vmem>>, %arg3: memref<1x128xf32, #tpu.memory_space<vmem>>, %arg4: memref<128x256xf32, #tpu.memory_space<vmem>>, %arg5: memref<1x256xf32, #tpu.memory_space<vmem>>, %arg6: memref<504x256xf32, #tpu.memory_space<vmem>>) attributes {dimension_semantics = [#tpu.dimension_semantics<parallel>], iteration_bounds = array<i64: 2>, scalar_prefetch = 0 : i64, scratch_operands = 0 : i64, tpu.core_type = #tpu.core_type<tc>, window_params = [{transform_indices = @transform_0, window_bounds = array<i64: 504, 256>}, {pipeline_mode = #tpu.pipeline_mode<synchronous>, transform_indices = @transform_1, window_bounds = array<i64: 256, 128>}, {pipeline_mode = #tpu.pipeline_mode<synchronous>, transform_indices = @transform_2, window_bounds = array<i64: 1, 128>}, {pipeline_mode = #tpu.pipeline_mode<synchronous>, transform_indices = @transform_3, window_bounds = array<i64: 128, 256>}, {pipeline_mode = #tpu.pipeline_mode<synchronous>, transform_indices = @transform_4, window_bounds = array<i64: 1, 256>}, {transform_indices = @transform_5, window_bounds = array<i64: 504, 256>}]} {
    %c0 = arith.constant 0 : index
    %c0_0 = arith.constant 0 : index
    %0 = vector.load %arg1[%c0, %c0_0] : memref<504x256xf32, #tpu.memory_space<vmem>>, vector<504x256xf32>
    %c0_1 = arith.constant 0 : index
    %c0_2 = arith.constant 0 : index
    %1 = vector.load %arg2[%c0_1, %c0_2] : memref<256x128xf32, #tpu.memory_space<vmem>>, vector<256x128xf32>
    %cst = arith.constant dense<0.000000e+00> : vector<504x128xf32>
    %2 = tpu.matmul %0, %1, %cst {dimension_numbers = #tpu.dot_dimension_numbers<[1], [0], [0], [1], [0, 0, 1, 1], [], []>} : vector<504x256xf32>, vector<256x128xf32>, vector<504x128xf32> -> vector<504x128xf32>
    %c0_3 = arith.constant 0 : index
    %c0_4 = arith.constant 0 : index
    %3 = vector.load %arg3[%c0_3, %c0_4] : memref<1x128xf32, #tpu.memory_space<vmem>>, vector<1x128xf32>
    %4 = vector.broadcast %3 : vector<1x128xf32> to vector<504x128xf32>
    %5 = arith.addf %2, %4 : vector<504x128xf32>
    %cst_5 = arith.constant 0.000000e+00 : f32
    %6 = vector.broadcast %cst_5 : f32 to vector<504x128xf32>
    %7 = arith.maximumf %5, %6 : vector<504x128xf32>
    %c0_6 = arith.constant 0 : index
    %c0_7 = arith.constant 0 : index
    %8 = vector.load %arg4[%c0_6, %c0_7] : memref<128x256xf32, #tpu.memory_space<vmem>>, vector<128x256xf32>
    %cst_8 = arith.constant dense<0.000000e+00> : vector<504x256xf32>
    %9 = tpu.matmul %7, %8, %cst_8 {dimension_numbers = #tpu.dot_dimension_numbers<[1], [0], [0], [1], [0, 0, 1, 1], [], []>} : vector<504x128xf32>, vector<128x256xf32>, vector<504x256xf32> -> vector<504x256xf32>
    %c0_9 = arith.constant 0 : index
    %c0_10 = arith.constant 0 : index
    %10 = vector.load %arg5[%c0_9, %c0_10] : memref<1x256xf32, #tpu.memory_space<vmem>>, vector<1x256xf32>
    %11 = vector.broadcast %10 : vector<1x256xf32> to vector<504x256xf32>
    %12 = arith.addf %9, %11 : vector<504x256xf32>
    %c0_11 = arith.constant 0 : index
    %c0_12 = arith.constant 0 : index
    %13 = vector.load %arg6[%c0_11, %c0_12] : memref<504x256xf32, #tpu.memory_space<vmem>>, vector<504x256xf32>
    tpu.vector_store %arg6[%c0_11, %c0_12], %12 {strides = array<i32>} : memref<504x256xf32, #tpu.memory_space<vmem>>, vector<504x256xf32>,
    return
  }
  func.func @transform_0(%arg0: i32) -> (i32, i32) {
    %c0_i32 = arith.constant 0 : i32
    %c0_i32_0 = arith.constant 0 : i32
    return %arg0, %c0_i32 : i32, i32
  }
  func.func @transform_1(%arg0: i32) -> (i32, i32) {
    %c0_i32 = arith.constant 0 : i32
    %c0_i32_0 = arith.constant 0 : i32
    %c0_i32_1 = arith.constant 0 : i32
    return %c0_i32, %c0_i32_0 : i32, i32
  }
  func.func @transform_2(%arg0: i32) -> (i32, i32) {
    %c0_i32 = arith.constant 0 : i32
    %c0_i32_0 = arith.constant 0 : i32
    %c0_i32_1 = arith.constant 0 : i32
    return %c0_i32, %c0_i32_0 : i32, i32
  }
  func.func @transform_3(%arg0: i32) -> (i32, i32) {
    %c0_i32 = arith.constant 0 : i32
    %c0_i32_0 = arith.constant 0 : i32
    %c0_i32_1 = arith.constant 0 : i32
    return %c0_i32, %c0_i32_0 : i32, i32
  }
  func.func @transform_4(%arg0: i32) -> (i32, i32) {
    %c0_i32 = arith.constant 0 : i32
    %c0_i32_0 = arith.constant 0 : i32
    %c0_i32_1 = arith.constant 0 : i32
    return %c0_i32, %c0_i32_0 : i32, i32
  }
  func.func @transform_5(%arg0: i32) -> (i32, i32) {
    %c0_i32 = arith.constant 0 : i32
    %c0_i32_0 = arith.constant 0 : i32
    return %arg0, %c0_i32 : i32, i32
  }
}

</mosaic_0001>

<llo_original>
// kernel: numerical_autoencoder.1
$region0: #{numerical_autoencoder.1}
  #allocation0 [shape = 'u32[]', space=smem, size = 0x4, offset = 0x4, fixed_abs, tag = 'smem constant byte address 0x4 - core index']
  #allocation1 [shape = 'u32[144,128]{1,0:T(1,128)}', space=vmem, size = 0x12000, scoped, tag = 'internal scratch']
  %s0 = inlined_call_operand.hbm [shape: f32[1000,256], index: 0, kind: input, shape index: {}]
  %s1 = inlined_call_operand.hbm [shape: f32[256,128], index: 1, kind: input, shape index: {}]
  %s2 = inlined_call_operand.vmem [shape: f32[1,128], index: 2, kind: input, shape index: {}]
  %s3 = inlined_call_operand.hbm [shape: f32[128,256], index: 3, kind: input, shape index: {}]
  %s4 = inlined_call_operand.vmem [shape: f32[1,256], index: 4, kind: input, shape index: {}]
  %s5 = inlined_call_operand.hbm [shape: f32[1000,256], index: 5, kind: output, shape index: {}]
  %s6 = sld [smem:[#allocation0]]
  $region65: #{numerical_autoencoder.1} parent=0
    _
  %s8 = ssub.s32 1, %s6
  %s9 = scalar_select 0, %s8, %s6
  $region1: #{numerical_autoencoder.1} parent=0
    #allocation2 [shape = 'u8[1032192]{0}', space=vmem, size = 0xfc000, scoped, tag = 'input window, operand 0']
    #allocation3 [shape = 's32[2]{0}', space=sflag, size = 0x8, scoped, tag = 'scoped memory for numerical_autoencoder.1']
    #allocation4 [shape = 's32[2]{0}', space=sflag, size = 0x8, scoped, tag = 'scoped memory for numerical_autoencoder.1']
    #allocation5 [shape = 'u8[131072]{0}', space=vmem, size = 0x20000, scoped, tag = 'input window, operand 1, single buffered']
    #allocation6 [shape = 's32[1]{0}', space=sflag, size = 0x4, scoped, tag = 'scoped memory for numerical_autoencoder.1']
    #allocation7 [shape = 'u8[131072]{0}', space=vmem, size = 0x20000, scoped, tag = 'input window, operand 3, single buffered']
    #allocation8 [shape = 'u8[1032192]{0}', space=vmem, size = 0xfc000, scoped, tag = 'output window, operand 0']
    %10 = vsyncpa [#allocation3], 0
    %s11 = scalar_lea.sflag [#allocation3], 1
    %12 = vsyncpa %s11, 0
    %13 = vsyncpa [#allocation6], 0
    %14 = vsyncpa [#allocation4], 0
    %s15 = scalar_lea.sflag [#allocation4], 1
    %16 = vsyncpa %s15, 0
    loop: start=0, step=1, limit=4
    $region2: #{numerical_autoencoder.1} parent=1 // loop_pre_header
      _
    $region3: #{numerical_autoencoder.1} parent=1 // loop_header
      %s18 = sphi 0, %s22
      %p19 = scmp.ge.s32.totalorder %s18, 4
      %s28 = sphi 0, %s30
      %s31 = sphi 0, %s28
      %s32 = sphi 0, %s31
      %s48 = sphi 0, %s32
      %s52 = sphi 0, %s52
      %s54 = sphi 0, %s52
      %s55 = sphi 0, %s54
      %s69 = sphi 0, %s55
      %s73 = sphi 0, %s73
      %s75 = sphi 0, %s73
      %s76 = sphi 0, %s75
      %s90 = sphi 0, %s76
      %s94 = sphi 0, %s94
      %s96 = sphi 0, %s94
      %s97 = sphi 0, %s96
      %s111 = sphi 0, %s97
      %s115 = sphi 0, %s115
      %s117 = sphi 0, %s115
      %s118 = sphi 0, %s117
      %s132 = sphi 0, %s118
      %s138 = sphi 0, %s140
      %s141 = sphi 0, %s138
      %s142 = sphi 0, %s141
      %s158 = sphi 0, %s142
    $region4: #{numerical_autoencoder.1} parent=1 // loop_header_branch
      %21 = sbr.rel (%p19) target = $region8
    $region5: #{numerical_autoencoder.1} parent=1 // loop_body
      %s23 = ssub.s32 %s18, 1
      %s24 = ssub.s32 %s18, 2
      %s25 = sadd.s32 %s18, 1
      %s26 = ssub.s32 %s18, %s25
      %p27 = scmp.eq.s32.totalorder %s26, 0
      %s29 = sadd.s32 %s28, 1
      %s30 = scalar_select %p27, %s28, %s29
      %p33 = pneg %p27
      %p34 = scmp.eq.s32.totalorder %s18, 1
      %p35 = por %p33, %p34
      %p36 = scmp.ne.s32.totalorder %s28, %s31
      %p37 = scmp.eq.s32.totalorder %s18, 0
      %p38 = por %p36, %p37
      %p39 = scmp.ne.s32.totalorder %s28, %s31
      %p40 = scmp.eq.s32.totalorder %s23, 1
      %p41 = por %p39, %p40
      %p42 = scmp.ne.s32.totalorder %s31, %s32
      %p43 = scmp.eq.s32.totalorder %s23, 0
      %p44 = por %p42, %p43
      %p45 = scmp.ne.s32.totalorder %s31, %s32
      %p46 = scmp.eq.s32.totalorder %s24, 1
      %p47 = por %p45, %p46
      %p49 = scmp.ne.s32.totalorder %s32, %s48
      %p50 = scmp.eq.s32.totalorder %s24, 0
      %p51 = por %p49, %p50
      %s53 = sadd.s32 %s52, 1
      %p56 = scmp.eq.s32.totalorder %s18, 1
      %p57 = scmp.ne.s32.totalorder %s52, %s54
      %p58 = scmp.eq.s32.totalorder %s18, 0
      %p59 = por %p57, %p58
      %p60 = scmp.ne.s32.totalorder %s52, %s54
      %p61 = scmp.eq.s32.totalorder %s23, 1
      %p62 = por %p60, %p61
      %p63 = scmp.ne.s32.totalorder %s54, %s55
      %p64 = scmp.eq.s32.totalorder %s23, 0
      %p65 = por %p63, %p64
      %p66 = scmp.ne.s32.totalorder %s54, %s55
      %p67 = scmp.eq.s32.totalorder %s24, 1
      %p68 = por %p66, %p67
      %p70 = scmp.ne.s32.totalorder %s55, %s69
      %p71 = scmp.eq.s32.totalorder %s24, 0
      %p72 = por %p70, %p71
      %s74 = sadd.s32 %s73, 1
      %p77 = scmp.eq.s32.totalorder %s18, 1
      %p78 = scmp.ne.s32.totalorder %s73, %s75
      %p79 = scmp.eq.s32.totalorder %s18, 0
      %p80 = por %p78, %p79
      %p81 = scmp.ne.s32.totalorder %s73, %s75
      %p82 = scmp.eq.s32.totalorder %s23, 1
      %p83 = por %p81, %p82
      %p84 = scmp.ne.s32.totalorder %s75, %s76
      %p85 = scmp.eq.s32.totalorder %s23, 0
      %p86 = por %p84, %p85
      %p87 = scmp.ne.s32.totalorder %s75, %s76
      %p88 = scmp.eq.s32.totalorder %s24, 1
      %p89 = por %p87, %p88
      %p91 = scmp.ne.s32.totalorder %s76, %s90
      %p92 = scmp.eq.s32.totalorder %s24, 0
      %p93 = por %p91, %p92
      %s95 = sadd.s32 %s94, 1
      %p98 = scmp.eq.s32.totalorder %s18, 1
      %p99 = scmp.ne.s32.totalorder %s94, %s96
      %p100 = scmp.eq.s32.totalorder %s18, 0
      %p101 = por %p99, %p100
      %p102 = scmp.ne.s32.totalorder %s94, %s96
      %p103 = scmp.eq.s32.totalorder %s23, 1
      %p104 = por %p102, %p103
      %p105 = scmp.ne.s32.totalorder %s96, %s97
      %p106 = scmp.eq.s32.totalorder %s23, 0
      %p107 = por %p105, %p106
      %p108 = scmp.ne.s32.totalorder %s96, %s97
      %p109 = scmp.eq.s32.totalorder %s24, 1
      %p110 = por %p108, %p109
      %p112 = scmp.ne.s32.totalorder %s97, %s111
      %p113 = scmp.eq.s32.totalorder %s24, 0
      %p114 = por %p112, %p113
      %s116 = sadd.s32 %s115, 1
      %p119 = scmp.eq.s32.totalorder %s18, 1
      %p120 = scmp.ne.s32.totalorder %s115, %s117
      %p121 = scmp.eq.s32.totalorder %s18, 0
      %p122 = por %p120, %p121
      %p123 = scmp.ne.s32.totalorder %s115, %s117
      %p124 = scmp.eq.s32.totalorder %s23, 1
      %p125 = por %p123, %p124
      %p126 = scmp.ne.s32.totalorder %s117, %s118
      %p127 = scmp.eq.s32.totalorder %s23, 0
      %p128 = por %p126, %p127
      %p129 = scmp.ne.s32.totalorder %s117, %s118
      %p130 = scmp.eq.s32.totalorder %s24, 1
      %p131 = por %p129, %p130
      %p133 = scmp.ne.s32.totalorder %s118, %s132
      %p134 = scmp.eq.s32.totalorder %s24, 0
      %p135 = por %p133, %p134
      %s136 = ssub.s32 %s18, %s25
      %p137 = scmp.eq.s32.totalorder %s136, 0
      %s139 = sadd.s32 %s138, 1
      %s140 = scalar_select %p137, %s138, %s139
      %p143 = pneg %p137
      %p144 = scmp.eq.s32.totalorder %s18, 1
      %p145 = por %p143, %p144
      %p146 = scmp.ne.s32.totalorder %s138, %s141
      %p147 = scmp.eq.s32.totalorder %s18, 0
      %p148 = por %p146, %p147
      %p149 = scmp.ne.s32.totalorder %s138, %s141
      %p150 = scmp.eq.s32.totalorder %s23, 1
      %p151 = por %p149, %p150
      %p152 = scmp.ne.s32.totalorder %s141, %s142
      %p153 = scmp.eq.s32.totalorder %s23, 0
      %p154 = por %p152, %p153
      %p155 = scmp.ne.s32.totalorder %s141, %s142
      %p156 = scmp.eq.s32.totalorder %s24, 1
      %p157 = por %p155, %p156
      %p159 = scmp.ne.s32.totalorder %s142, %s158
      %p160 = scmp.eq.s32.totalorder %s24, 0
      %p161 = por %p159, %p160
      %p162 = scmp.le.s32.totalorder 1, %s18
      %p163 = scmp.lt.s32.totalorder %s18, 3
      %p164 = pnand %p162, %p163
      %p165 = pneg %p164
      // Predicated region
      $region9: #{numerical_autoencoder.1} parent=5 // pred_check
        _
      $region10: #{numerical_autoencoder.1} parent=5 // pred_check_branch
        %167 = sbr.rel (%p164) target = $region12
      $region11: #{numerical_autoencoder.1} parent=5 // pred_region
        %s168 = ssub.s32 %s18, 1
        // Predicated region
        $region13: #{numerical_autoencoder.1} parent=11 // pred_check
          %p169 = pneg %p65
        $region14: #{numerical_autoencoder.1} parent=11 // pred_check_branch
          %171 = sbr.rel (%p169) target = $region16
        $region15: #{numerical_autoencoder.1} parent=11 // pred_region
          %s173 = ssub.s32 4096, 4096
          %174 = vsyncadd [#allocation6], %s173
          %s175 = sshll.u32 [#allocation5], 4
          %s176 = int_to_ptr.vmem [resolvable:$true] %s175
          %181 = dma.hbm_to_vmem [thread:$0]  %s1, 4096, %s176, [#allocation6], 128, 128, 8
        $region16: #{numerical_autoencoder.1} parent=11 // pred_fallthru
          _
        // Predicated region
        $region17: #{numerical_autoencoder.1} parent=11 // pred_check
          %p182 = pneg %p86
        $region18: #{numerical_autoencoder.1} parent=11 // pred_check_branch
          %184 = sbr.rel (%p182) target = $region20
        $region19: #{numerical_autoencoder.1} parent=11 // pred_region
          _
        $region20: #{numerical_autoencoder.1} parent=11 // pred_fallthru
          _
        // Predicated region
        $region21: #{numerical_autoencoder.1} parent=11 // pred_check
          %p185 = pneg %p107
        $region22: #{numerical_autoencoder.1} parent=11 // pred_check_branch
          %187 = sbr.rel (%p185) target = $region24
        $region23: #{numerical_autoencoder.1} parent=11 // pred_region
          %s189 = ssub.s32 4096, 4096
          %190 = vsyncadd [#allocation6], %s189
          %s191 = sshll.u32 [#allocation7], 4
          %s192 = int_to_ptr.vmem [resolvable:$true] %s191
          %197 = dma.hbm_to_vmem [thread:$0]  %s3, 4096, %s192, [#allocation6], 256, 256, 16
        $region24: #{numerical_autoencoder.1} parent=11 // pred_fallthru
          _
        // Predicated region
        $region25: #{numerical_autoencoder.1} parent=11 // pred_check
          %p198 = pneg %p128
        $region26: #{numerical_autoencoder.1} parent=11 // pred_check_branch
          %200 = sbr.rel (%p198) target = $region28
        $region27: #{numerical_autoencoder.1} parent=11 // pred_region
          _
        $region28: #{numerical_autoencoder.1} parent=11 // pred_fallthru
          _
      $region12: #{numerical_autoencoder.1} parent=5 // pred_fallthru
        _
      %p201 = scmp.lt.s32.totalorder %s18, 2
      // Predicated region
      $region29: #{numerical_autoencoder.1} parent=5 // pred_check
        %p202 = pneg %p201
      $region30: #{numerical_autoencoder.1} parent=5 // pred_check_branch
        %204 = sbr.rel (%p202) target = $region32
      $region31: #{numerical_autoencoder.1} parent=5 // pred_region
        // Predicated region
        $region33: #{numerical_autoencoder.1} parent=31 // pred_check
          %p205 = pneg %p38
        $region34: #{numerical_autoencoder.1} parent=31 // pred_check_branch
          %207 = sbr.rel (%p205) target = $region36
        $region35: #{numerical_autoencoder.1} parent=31 // pred_region
          %s208 = sand.u32 %s28, 1
          %s209 = scalar_lea.sflag [#allocation3], %s208
          %s210 = sand.u32 %s28, 1
          %s211 = smul.addr %s210, 1008
          %s212 = scalar_lea.vmem [#allocation2], %s211
          %s213 = smul.u32 63, %s18
          %s214 = ssub.s32 125, %s213
          %p215 = scmp.lt.s32.totalorder %s214, 63
          %s216 = scalar_select %p215, %s214, 63
          %s217 = smul.u32 128, %s216
          %s218 = smul.u32 %s217, 2
          %s220 = ssub.s32 16128, %s218
          %221 = vsyncadd %s209, %s220
          %p222 = scmp.ne.s32.totalorder 0, %s218
          %s223 = smul.addr %s213, 2
          %s224 = smul.addr %s223, 128
          %s225 = scalar_lea.hbm %s0, %s224
          %s226 = smul.u32 16, %s216
          %s227 = sshll.u32 %s212, 4
          %s228 = int_to_ptr.vmem [resolvable:$true] %s227
          %s229 = sshll.u32 %s226, 4
          %233 = dma.hbm_to_vmem [thread:$0]  (%p222), %s225, %s229, %s228, %s209, 256, 256, 16
        $region36: #{numerical_autoencoder.1} parent=31 // pred_fallthru
          _
      $region32: #{numerical_autoencoder.1} parent=5 // pred_fallthru
        _
      %p234 = scmp.le.s32.totalorder 1, %s18
      %p235 = scmp.lt.s32.totalorder %s18, 3
      %p236 = pnand %p234, %p235
      %p237 = pneg %p236
      // Predicated region
      $region37: #{numerical_autoencoder.1} parent=5 // pred_check
        _
      $region38: #{numerical_autoencoder.1} parent=5 // pred_check_branch
        %239 = sbr.rel (%p236) target = $region40
      $region39: #{numerical_autoencoder.1} parent=5 // pred_region
        %s240 = ssub.s32 %s18, 1
        %s241 = sand.u32 %s31, 1
        %s242 = scalar_lea.sflag [#allocation3], %s241
        %s243 = sand.u32 %s31, 1
        %s244 = smul.addr %s243, 1008
        %s245 = scalar_lea.vmem [#allocation2], %s244
        // Predicated region
        $region41: #{numerical_autoencoder.1} parent=39 // pred_check
          %p246 = pneg %p44
        $region42: #{numerical_autoencoder.1} parent=39 // pred_check_branch
          %248 = sbr.rel (%p246) target = $region44
        $region43: #{numerical_autoencoder.1} parent=39 // pred_region
          %249 = dma.done %s242, 16128
        $region44: #{numerical_autoencoder.1} parent=39 // pred_fallthru
          _
        // Predicated region
        $region45: #{numerical_autoencoder.1} parent=39 // pred_check
          %p250 = pneg %p65
        $region46: #{numerical_autoencoder.1} parent=39 // pred_check_branch
          %252 = sbr.rel (%p250) target = $region48
        $region47: #{numerical_autoencoder.1} parent=39 // pred_region
          %253 = dma.done [#allocation6], 4096
        $region48: #{numerical_autoencoder.1} parent=39 // pred_fallthru
          _
        // Predicated region
        $region49: #{numerical_autoencoder.1} parent=39 // pred_check
          %p254 = pneg %p107
        $region50: #{numerical_autoencoder.1} parent=39 // pred_check_branch
          %256 = sbr.rel (%p254) target = $region52
        $region51: #{numerical_autoencoder.1} parent=39 // pred_region
          %257 = dma.done [#allocation6], 4096
        $region52: #{numerical_autoencoder.1} parent=39 // pred_fallthru
          _
        %s258 = sand.u32 %s31, 1
        %s259 = scalar_lea.sflag [#allocation3], %s258
        %s260 = sand.u32 %s31, 1
        %s261 = smul.addr %s260, 1008
        %s262 = scalar_lea.vmem [#allocation2], %s261
        %p263 = pneg %p44
        %p264 = pneg %p41
        %p265 = pneg %p65
        %p266 = pneg %p62
        %p267 = pneg %p86
        %p268 = pneg %p83
        %p269 = pneg %p107
        %p270 = pneg %p104
        %p271 = pneg %p128
        %p272 = pneg %p125
        %p273 = pneg %p154
        %p274 = pneg %p151
        %s275 = sand.u32 %s141, 1
        %s276 = scalar_lea.sflag [#allocation4], %s275
        %s277 = sand.u32 %s141, 1
        %s278 = smul.addr %s277, 1008
        %s279 = scalar_lea.vmem [#allocation8], %s278
        %s280 = smul.u32 63, %s23
        %s281 = ssub.s32 125, %s280
        %p282 = scmp.lt.s32.totalorder %s281, 63
        %s283 = scalar_select %p282, %s281, 63
        %s284 = smul.u32 128, %s283
        %s285 = smul.u32 %s284, 2
        %s286 = smul.u32 63, %s23
        %s287 = ssub.s32 125, %s286
        %p288 = scmp.lt.s32.totalorder %s287, 63
        %s289 = scalar_select %p288, %s287, 63
        %s290 = smul.u32 128, %s289
        %s291 = smul.u32 %s290, 2
        %v292 = vld [vmem:[%s245] sm:$0xff]
        %v293 = vld [vmem:[%s245 + $0x8] sm:$0xff]
        %v294 = vld [vmem:[%s245 + $0x10] sm:$0xff]
        %v295 = vld [vmem:[%s245 + $0x18] sm:$0xff]
        %v296 = vld [vmem:[%s245 + $0x20] sm:$0xff]
        %v297 = vld [vmem:[%s245 + $0x28] sm:$0xff]
        %v298 = vld [vmem:[%s245 + $0x30] sm:$0xff]
        %v299 = vld [vmem:[%s245 + $0x38] sm:$0xff]
        %v300 = vld [vmem:[%s245 + $0x40] sm:$0xff]
        %v301 = vld [vmem:[%s245 + $0x48] sm:$0xff]
        %v302 = vld [vmem:[%s245 + $0x50] sm:$0xff]
        %v303 = vld [vmem:[%s245 + $0x58] sm:$0xff]
        %v304 = vld [vmem:[%s245 + $0x60] sm:$0xff]
        %v305 = vld [vmem:[%s245 + $0x68] sm:$0xff]
        %v306 = vld [vmem:[%s245 + $0x70] sm:$0xff]
        %v307 = vld [vmem:[%s245 + $0x78] sm:$0xff]
        %v308 = vld [vmem:[%s245 + $0x80] sm:$0xff]
        %v309 = vld [vmem:[%s245 + $0x88] sm:$0xff]
        %v310 = vld [vmem:[%s245 + $0x90] sm:$0xff]
        %v311 = vld [vmem:[%s245 + $0x98] sm:$0xff]
        %v312 = vld [vmem:[%s245 + $0xa0] sm:$0xff]
        %v313 = vld [vmem:[%s245 + $0xa8] sm:$0xff]
        %v314 = vld [vmem:[%s245 + $0xb0] sm:$0xff]
        %v315 = vld [vmem:[%s245 + $0xb8] sm:$0xff]
        %v316 = vld [vmem:[%s245 + $0xc0] sm:$0xff]
        %v317 = vld [vmem:[%s245 + $0xc8] sm:$0xff]
        %v318 = vld [vmem:[%s245 + $0xd0] sm:$0xff]
        %v319 = vld [vmem:[%s245 + $0xd8] sm:$0xff]
        %v320 = vld [vmem:[%s245 + $0xe0] sm:$0xff]
        %v321 = vld [vmem:[%s245 + $0xe8] sm:$0xff]
        %v322 = vld [vmem:[%s245 + $0xf0] sm:$0xff]
        %v323 = vld [vmem:[%s245 + $0xf8] sm:$0xff]
        %v324 = vld [vmem:[%s245 + $0x100] sm:$0xff]
        %v325 = vld [vmem:[%s245 + $0x108] sm:$0xff]
        %v326 = vld [vmem:[%s245 + $0x110] sm:$0xff]
        %v327 = vld [vmem:[%s245 + $0x118] sm:$0xff]
        %v328 = vld [vmem:[%s245 + $0x120] sm:$0xff]
        %v329 = vld [vmem:[%s245 + $0x128] sm:$0xff]
        %v330 = vld [vmem:[%s245 + $0x130] sm:$0xff]
        %v331 = vld [vmem:[%s245 + $0x138] sm:$0xff]
        %v332 = vld [vmem:[%s245 + $0x140] sm:$0xff]
        %v333 = vld [vmem:[%s245 + $0x148] sm:$0xff]
        %v334 = vld [vmem:[%s245 + $0x150] sm:$0xff]
        %v335 = vld [vmem:[%s245 + $0x158] sm:$0xff]
        %v336 = vld [vmem:[%s245 + $0x160] sm:$0xff]
        %v337 = vld [vmem:[%s245 + $0x168] sm:$0xff]
        %v338 = vld [vmem:[%s245 + $0x170] sm:$0xff]
        %v339 = vld [vmem:[%s245 + $0x178] sm:$0xff]
        %v340 = vld [vmem:[%s245 + $0x180] sm:$0xff]
        %v341 = vld [vmem:[%s245 + $0x188] sm:$0xff]
        %v342 = vld [vmem:[%s245 + $0x190] sm:$0xff]
        %v343 = vld [vmem:[%s245 + $0x198] sm:$0xff]
        %v344 = vld [vmem:[%s245 + $0x1a0] sm:$0xff]
        %v345 = vld [vmem:[%s245 + $0x1a8] sm:$0xff]
        %v346 = vld [vmem:[%s245 + $0x1b0] sm:$0xff]
        %v347 = vld [vmem:[%s245 + $0x1b8] sm:$0xff]
        %v348 = vld [vmem:[%s245 + $0x1c0] sm:$0xff]
        %v349 = vld [vmem:[%s245 + $0x1c8] sm:$0xff]
        %v350 = vld [vmem:[%s245 + $0x1d0] sm:$0xff]
        %v351 = vld [vmem:[%s245 + $0x1d8] sm:$0xff]
        %v352 = vld [vmem:[%s245 + $0x1e0] sm:$0xff]
        %v353 = vld [vmem:[%s245 + $0x1e8] sm:$0xff]
        %v354 = vld [vmem:[%s245 + $0x1f0] sm:$0xff]
        %v355 = vld [vmem:[%s245 + $0x1f8] sm:$0xff]
        %v356 = vld [vmem:[%s245 + $0x200] sm:$0xff]
        %v357 = vld [vmem:[%s245 + $0x208] sm:$0xff]
        %v358 = vld [vmem:[%s245 + $0x210] sm:$0xff]
        %v359 = vld [vmem:[%s245 + $0x218] sm:$0xff]
        %v360 = vld [vmem:[%s245 + $0x220] sm:$0xff]
        %v361 = vld [vmem:[%s245 + $0x228] sm:$0xff]
        %v362 = vld [vmem:[%s245 + $0x230] sm:$0xff]
        %v363 = vld [vmem:[%s245 + $0x238] sm:$0xff]
        %v364 = vld [vmem:[%s245 + $0x240] sm:$0xff]
        %v365 = vld [vmem:[%s245 + $0x248] sm:$0xff]
        %v366 = vld [vmem:[%s245 + $0x250] sm:$0xff]
        %v367 = vld [vmem:[%s245 + $0x258] sm:$0xff]
        %v368 = vld [vmem:[%s245 + $0x260] sm:$0xff]
        %v369 = vld [vmem:[%s245 + $0x268] sm:$0xff]
        %v370 = vld [vmem:[%s245 + $0x270] sm:$0xff]
        %v371 = vld [vmem:[%s245 + $0x278] sm:$0xff]
        %v372 = vld [vmem:[%s245 + $0x280] sm:$0xff]
        %v373 = vld [vmem:[%s245 + $0x288] sm:$0xff]
        %v374 = vld [vmem:[%s245 + $0x290] sm:$0xff]
        %v375 = vld [vmem:[%s245 + $0x298] sm:$0xff]
        %v376 = vld [vmem:[%s245 + $0x2a0] sm:$0xff]
        %v377 = vld [vmem:[%s245 + $0x2a8] sm:$0xff]
        %v378 = vld [vmem:[%s245 + $0x2b0] sm:$0xff]
        %v379 = vld [vmem:[%s245 + $0x2b8] sm:$0xff]
        %v380 = vld [vmem:[%s245 + $0x2c0] sm:$0xff]
        %v381 = vld [vmem:[%s245 + $0x2c8] sm:$0xff]
        %v382 = vld [vmem:[%s245 + $0x2d0] sm:$0xff]
        %v383 = vld [vmem:[%s245 + $0x2d8] sm:$0xff]
        %v384 = vld [vmem:[%s245 + $0x2e0] sm:$0xff]
        %v385 = vld [vmem:[%s245 + $0x2e8] sm:$0xff]
        %v386 = vld [vmem:[%s245 + $0x2f0] sm:$0xff]
        %v387 = vld [vmem:[%s245 + $0x2f8] sm:$0xff]
        %v388 = vld [vmem:[%s245 + $0x300] sm:$0xff]
        %v389 = vld [vmem:[%s245 + $0x308] sm:$0xff]
        %v390 = vld [vmem:[%s245 + $0x310] sm:$0xff]
        %v391 = vld [vmem:[%s245 + $0x318] sm:$0xff]
        %v392 = vld [vmem:[%s245 + $0x320] sm:$0xff]
        %v393 = vld [vmem:[%s245 + $0x328] sm:$0xff]
        %v394 = vld [vmem:[%s245 + $0x330] sm:$0xff]
        %v395 = vld [vmem:[%s245 + $0x338] sm:$0xff]
        %v396 = vld [vmem:[%s245 + $0x340] sm:$0xff]
        %v397 = vld [vmem:[%s245 + $0x348] sm:$0xff]
        %v398 = vld [vmem:[%s245 + $0x350] sm:$0xff]
        %v399 = vld [vmem:[%s245 + $0x358] sm:$0xff]
        %v400 = vld [vmem:[%s245 + $0x360] sm:$0xff]
        %v401 = vld [vmem:[%s245 + $0x368] sm:$0xff]
        %v402 = vld [vmem:[%s245 + $0x370] sm:$0xff]
        %v403 = vld [vmem:[%s245 + $0x378] sm:$0xff]
        %v404 = vld [vmem:[%s245 + $0x380] sm:$0xff]
        %v405 = vld [vmem:[%s245 + $0x388] sm:$0xff]
        %v406 = vld [vmem:[%s245 + $0x390] sm:$0xff]
        %v407 = vld [vmem:[%s245 + $0x398] sm:$0xff]
        %v408 = vld [vmem:[%s245 + $0x3a0] sm:$0xff]
        %v409 = vld [vmem:[%s245 + $0x3a8] sm:$0xff]
        %v410 = vld [vmem:[%s245 + $0x3b0] sm:$0xff]
        %v411 = vld [vmem:[%s245 + $0x3b8] sm:$0xff]
        %v412 = vld [vmem:[%s245 + $0x3c0] sm:$0xff]
        %v413 = vld [vmem:[%s245 + $0x3c8] sm:$0xff]
        %v414 = vld [vmem:[%s245 + $0x3d0] sm:$0xff]
        %v415 = vld [vmem:[%s245 + $0x3d8] sm:$0xff]
        %v416 = vld [vmem:[%s245 + $0x3e0] sm:$0xff]
        %v417 = vld [vmem:[%s245 + $0x3e8] sm:$0xff]
        %v418 = vld [vmem:[#allocation5] sm:$0xff]
        %v419 = vld [vmem:[#allocation5 + $0x8] sm:$0xff]
        %v420 = vld [vmem:[#allocation5 + $0x10] sm:$0xff]
        %v421 = vld [vmem:[#allocation5 + $0x18] sm:$0xff]
        %v422 = vld [vmem:[#allocation5 + $0x20] sm:$0xff]
        %v423 = vld [vmem:[#allocation5 + $0x28] sm:$0xff]
        %v424 = vld [vmem:[#allocation5 + $0x30] sm:$0xff]
        %v425 = vld [vmem:[#allocation5 + $0x38] sm:$0xff]
        %v426 = vld [vmem:[#allocation5 + $0x40] sm:$0xff]
        %v427 = vld [vmem:[#allocation5 + $0x48] sm:$0xff]
        %v428 = vld [vmem:[#allocation5 + $0x50] sm:$0xff]
        %v429 = vld [vmem:[#allocation5 + $0x58] sm:$0xff]
        %v430 = vld [vmem:[#allocation5 + $0x60] sm:$0xff]
        %v431 = vld [vmem:[#allocation5 + $0x68] sm:$0xff]
        %v432 = vld [vmem:[#allocation5 + $0x70] sm:$0xff]
        %v433 = vld [vmem:[#allocation5 + $0x78] sm:$0xff]
        %v434 = vld [vmem:[#allocation5 + $0x80] sm:$0xff]
        %v435 = vld [vmem:[#allocation5 + $0x88] sm:$0xff]
        %v436 = vld [vmem:[#allocation5 + $0x90] sm:$0xff]
        %v437 = vld [vmem:[#allocation5 + $0x98] sm:$0xff]
        %v438 = vld [vmem:[#allocation5 + $0xa0] sm:$0xff]
        %v439 = vld [vmem:[#allocation5 + $0xa8] sm:$0xff]
        %v440 = vld [vmem:[#allocation5 + $0xb0] sm:$0xff]
        %v441 = vld [vmem:[#allocation5 + $0xb8] sm:$0xff]
        %v442 = vld [vmem:[#allocation5 + $0xc0] sm:$0xff]
        %v443 = vld [vmem:[#allocation5 + $0xc8] sm:$0xff]
        %v444 = vld [vmem:[#allocation5 + $0xd0] sm:$0xff]
        %v445 = vld [vmem:[#allocation5 + $0xd8] sm:$0xff]
        %v446 = vld [vmem:[#allocation5 + $0xe0] sm:$0xff]
        %v447 = vld [vmem:[#allocation5 + $0xe8] sm:$0xff]
        %v448 = vld [vmem:[#allocation5 + $0xf0] sm:$0xff]
        %v449 = vld [vmem:[#allocation5 + $0xf8] sm:$0xff]
        %v450 = vld [vmem:[%s2] sm:$0x1]
        %v452 = vlaneseq
        %v453 = vshrl.u32 %v452, 7
        %v454 = vsub.s32 0, %v453
        %v455 = vrot.slane %v450, %v454
        %457 = vmatprep.subr.mxu0 0.0
        %458 = vmatpush1.msra.mxu0 %v418
        %459 = vmatprep.subr.mxu0 0.0
        %460 = vmatpush1.msra.mxu0 %v419
        %461 = vmatprep.subr.mxu0 0.0
        %462 = vmatpush1.msra.mxu0 %v420
        %463 = vmatprep.subr.mxu0 0.0
        %464 = vmatpush1.msra.mxu0 %v421
        %465 = vmatprep.subr.mxu0 0.0
        %466 = vmatpush1.msra.mxu0 %v422
        %467 = vmatprep.subr.mxu0 0.0
        %468 = vmatpush1.msra.mxu0 %v423
        %469 = vmatprep.subr.mxu0 0.0
        %470 = vmatpush1.msra.mxu0 %v424
        %471 = vmatprep.subr.mxu0 0.0
        %472 = vmatpush1.msra.mxu0 %v425
        %473 = vmatprep.subr.mxu0 0.0
        %474 = vmatpush1.msra.mxu0 %v426
        %475 = vmatprep.subr.mxu0 0.0
        %476 = vmatpush1.msra.mxu0 %v427
        %477 = vmatprep.subr.mxu0 0.0
        %478 = vmatpush1.msra.mxu0 %v428
        %479 = vmatprep.subr.mxu0 0.0
        %480 = vmatpush1.msra.mxu0 %v429
        %481 = vmatprep.subr.mxu0 0.0
        %482 = vmatpush1.msra.mxu0 %v430
        %483 = vmatprep.subr.mxu0 0.0
        %484 = vmatpush1.msra.mxu0 %v431
        %485 = vmatprep.subr.mxu0 0.0
        %486 = vmatpush1.msra.mxu0 %v432
        %487 = vmatprep.subr.mxu0 0.0
        %488 = vmatpush1.msra.mxu0 %v433
        %489 = vmatprep.subr.mxu0 0.0
        %490 = vmatpush1.msra.mxu0 %v434
        %491 = vmatprep.subr.mxu0 0.0
        %492 = vmatpush1.msra.mxu0 %v435
        %493 = vmatprep.subr.mxu0 0.0
        %494 = vmatpush1.msra.mxu0 %v436
        %495 = vmatprep.subr.mxu0 0.0
        %496 = vmatpush1.msra.mxu0 %v437
        %497 = vmatprep.subr.mxu0 0.0
        %498 = vmatpush1.msra.mxu0 %v438
        %499 = vmatprep.subr.mxu0 0.0
        %500 = vmatpush1.msra.mxu0 %v439
        %501 = vmatprep.subr.mxu0 0.0
        %502 = vmatpush1.msra.mxu0 %v440
        %503 = vmatprep.subr.mxu0 0.0
        %504 = vmatpush1.msra.mxu0 %v441
        %505 = vmatprep.subr.mxu0 0.0
        %506 = vmatpush1.msra.mxu0 %v442
        %507 = vmatprep.subr.mxu0 0.0
        %508 = vmatpush1.msra.mxu0 %v443
        %509 = vmatprep.subr.mxu0 0.0
        %510 = vmatpush1.msra.mxu0 %v444
        %511 = vmatprep.subr.mxu0 0.0
        %512 = vmatpush1.msra.mxu0 %v445
        %513 = vmatprep.subr.mxu0 0.0
        %514 = vmatpush1.msra.mxu0 %v446
        %515 = vmatprep.subr.mxu0 0.0
        %516 = vmatpush1.msra.mxu0 %v447
        %517 = vmatprep.subr.mxu0 0.0
        %518 = vmatpush1.msra.mxu0 %v448
        %519 = vmatprep.subr.mxu0 0.0
        %520 = vmatpush1.msra.mxu0 %v449
        %521 = vmatprep.mubr.f32.mxu0 %v293
        %522 = vmatmul.mubr.f32.gmra.mrb[0].mxu0 %v292
        %v523 = vpop.f32.mrb[0].mxu0
        %v524 = vadd.f32 %v455, %v523
        %v525 = vpop.f32.mrb[0].mxu0
        %526 = vmatprep.mubr.f32.mxu0 %v295
        %527 = vmatmul.mubr.f32.gmra.mrb[0].mxu0 %v294
        %v528 = vpop.f32.mrb[0].mxu0
        %v529 = vadd.f32 %v455, %v528
        %v530 = vpop.f32.mrb[0].mxu0
        %531 = vmatprep.mubr.f32.mxu0 %v297
        %532 = vmatmul.mubr.f32.gmra.mrb[0].mxu0 %v296
        %v533 = vpop.f32.mrb[0].mxu0
        %v534 = vadd.f32 %v455, %v533
        %v535 = vpop.f32.mrb[0].mxu0
        %536 = vmatprep.mubr.f32.mxu0 %v299
        %537 = vmatmul.mubr.f32.gmra.mrb[0].mxu0 %v298
        %v538 = vpop.f32.mrb[0].mxu0
        %v539 = vadd.f32 %v455, %v538
        %v540 = vpop.f32.mrb[0].mxu0
        %541 = vmatprep.mubr.f32.mxu0 %v301
        %542 = vmatmul.mubr.f32.gmra.mrb[0].mxu0 %v300
        %v543 = vpop.f32.mrb[0].mxu0
        %v544 = vadd.f32 %v455, %v543
        %v545 = vpop.f32.mrb[0].mxu0
        %546 = vmatprep.mubr.f32.mxu0 %v303
        %547 = vmatmul.mubr.f32.gmra.mrb[0].mxu0 %v302
        %v548 = vpop.f32.mrb[0].mxu0
        %v549 = vadd.f32 %v455, %v548
        %v550 = vpop.f32.mrb[0].mxu0
        %551 = vmatprep.mubr.f32.mxu0 %v305
        %552 = vmatmul.mubr.f32.gmra.mrb[0].mxu0 %v304
        %v553 = vpop.f32.mrb[0].mxu0
        %v554 = vadd.f32 %v455, %v553
        %v555 = vpop.f32.mrb[0].mxu0
        %556 = vmatprep.mubr.f32.mxu0 %v307
        %557 = vmatmul.mubr.f32.gmra.mrb[0].mxu0 %v306
        %v558 = vpop.f32.mrb[0].mxu0
        %v559 = vadd.f32 %v455, %v558
        %v560 = vpop.f32.mrb[0].mxu0
        %561 = vmatprep.mubr.f32.mxu0 %v309
        %562 = vmatmul.mubr.f32.gmra.mrb[0].mxu0 %v308
        %v563 = vpop.f32.mrb[0].mxu0
        %v564 = vadd.f32 %v455, %v563
        %v565 = vpop.f32.mrb[0].mxu0
        %566 = vmatprep.mubr.f32.mxu0 %v311
        %567 = vmatmul.mubr.f32.gmra.mrb[0].mxu0 %v310
        %v568 = vpop.f32.mrb[0].mxu0
        %v569 = vadd.f32 %v455, %v568
        %v570 = vpop.f32.mrb[0].mxu0
        %571 = vmatprep.mubr.f32.mxu0 %v313
        %572 = vmatmul.mubr.f32.gmra.mrb[0].mxu0 %v312
        %v573 = vpop.f32.mrb[0].mxu0
        %v574 = vadd.f32 %v455, %v573
        %v575 = vpop.f32.mrb[0].mxu0
        %576 = vmatprep.mubr.f32.mxu0 %v315
        %577 = vmatmul.mubr.f32.gmra.mrb[0].mxu0 %v314
        %v578 = vpop.f32.mrb[0].mxu0
        %v579 = vadd.f32 %v455, %v578
        %v580 = vpop.f32.mrb[0].mxu0
        %581 = vmatprep.mubr.f32.mxu0 %v317
        %582 = vmatmul.mubr.f32.gmra.mrb[0].mxu0 %v316
        %v583 = vpop.f32.mrb[0].mxu0
        %v584 = vadd.f32 %v455, %v583
        %v585 = vpop.f32.mrb[0].mxu0
        %586 = vmatprep.mubr.f32.mxu0 %v319
        %587 = vmatmul.mubr.f32.gmra.mrb[0].mxu0 %v318
        %v588 = vpop.f32.mrb[0].mxu0
        %v589 = vadd.f32 %v455, %v588
        %v590 = vpop.f32.mrb[0].mxu0
        %591 = vmatprep.mubr.f32.mxu0 %v321
        %592 = vmatmul.mubr.f32.gmra.mrb[0].mxu0 %v320
        %v593 = vpop.f32.mrb[0].mxu0
        %v594 = vadd.f32 %v455, %v593
        %v595 = vpop.f32.mrb[0].mxu0
        %596 = vmatprep.mubr.f32.mxu0 %v323
        %597 = vmatmul.mubr.f32.gmra.mrb[0].mxu0 %v322
        %v598 = vpop.f32.mrb[0].mxu0
        %v599 = vadd.f32 %v455, %v598
        %v600 = vpop.f32.mrb[0].mxu0
        %601 = vmatprep.mubr.f32.mxu0 %v325
        %602 = vmatmul.mubr.f32.gmra.mrb[0].mxu0 %v324
        %v603 = vpop.f32.mrb[0].mxu0
        %v604 = vadd.f32 %v455, %v603
        %v605 = vpop.f32.mrb[0].mxu0
        %606 = vmatprep.mubr.f32.mxu0 %v327
        %607 = vmatmul.mubr.f32.gmra.mrb[0].mxu0 %v326
        %v608 = vpop.f32.mrb[0].mxu0
        %v609 = vadd.f32 %v455, %v608
        %v610 = vpop.f32.mrb[0].mxu0
        %611 = vmatprep.mubr.f32.mxu0 %v329
        %612 = vmatmul.mubr.f32.gmra.mrb[0].mxu0 %v328
        %v613 = vpop.f32.mrb[0].mxu0
        %v614 = vadd.f32 %v455, %v613
        %v615 = vpop.f32.mrb[0].mxu0
        %616 = vmatprep.mubr.f32.mxu0 %v331
        %617 = vmatmul.mubr.f32.gmra.mrb[0].mxu0 %v330
        %v618 = vpop.f32.mrb[0].mxu0
        %v619 = vadd.f32 %v455, %v618
        %v620 = vpop.f32.mrb[0].mxu0
        %621 = vmatprep.mubr.f32.mxu0 %v333
        %622 = vmatmul.mubr.f32.gmra.mrb[0].mxu0 %v332
        %v623 = vpop.f32.mrb[0].mxu0
        %v624 = vadd.f32 %v455, %v623
        %v625 = vpop.f32.mrb[0].mxu0
        %626 = vmatprep.mubr.f32.mxu0 %v335
        %627 = vmatmul.mubr.f32.gmra.mrb[0].mxu0 %v334
        %v628 = vpop.f32.mrb[0].mxu0
        %v629 = vadd.f32 %v455, %v628
        %v630 = vpop.f32.mrb[0].mxu0
        %631 = vmatprep.mubr.f32.mxu0 %v337
        %632 = vmatmul.mubr.f32.gmra.mrb[0].mxu0 %v336
        %v633 = vpop.f32.mrb[0].mxu0
        %v634 = vadd.f32 %v455, %v633
        %v635 = vpop.f32.mrb[0].mxu0
        %636 = vmatprep.mubr.f32.mxu0 %v339
        %637 = vmatmul.mubr.f32.gmra.mrb[0].mxu0 %v338
        %v638 = vpop.f32.mrb[0].mxu0
        %v639 = vadd.f32 %v455, %v638
        %v640 = vpop.f32.mrb[0].mxu0
        %641 = vmatprep.mubr.f32.mxu0 %v341
        %642 = vmatmul.mubr.f32.gmra.mrb[0].mxu0 %v340
        %v643 = vpop.f32.mrb[0].mxu0
        %v644 = vadd.f32 %v455, %v643
        %v645 = vpop.f32.mrb[0].mxu0
        %646 = vmatprep.mubr.f32.mxu0 %v343
        %647 = vmatmul.mubr.f32.gmra.mrb[0].mxu0 %v342
        %v648 = vpop.f32.mrb[0].mxu0
        %v649 = vadd.f32 %v455, %v648
        %v650 = vpop.f32.mrb[0].mxu0
        %651 = vmatprep.mubr.f32.mxu0 %v345
        %652 = vmatmul.mubr.f32.gmra.mrb[0].mxu0 %v344
        %v653 = vpop.f32.mrb[0].mxu0
        %v654 = vadd.f32 %v455, %v653
        %v655 = vpop.f32.mrb[0].mxu0
        %656 = vmatprep.mubr.f32.mxu0 %v347
        %657 = vmatmul.mubr.f32.gmra.mrb[0].mxu0 %v346
        %v658 = vpop.f32.mrb[0].mxu0
        %v659 = vadd.f32 %v455, %v658
        %v660 = vpop.f32.mrb[0].mxu0
        %661 = vmatprep.mubr.f32.mxu0 %v349
        %662 = vmatmul.mubr.f32.gmra.mrb[0].mxu0 %v348
        %v663 = vpop.f32.mrb[0].mxu0
        %v664 = vadd.f32 %v455, %v663
        %v665 = vpop.f32.mrb[0].mxu0
        %666 = vmatprep.mubr.f32.mxu0 %v351
        %667 = vmatmul.mubr.f32.gmra.mrb[0].mxu0 %v350
        %v668 = vpop.f32.mrb[0].mxu0
        %v669 = vadd.f32 %v455, %v668
        %v670 = vpop.f32.mrb[0].mxu0
        %671 = vmatprep.mubr.f32.mxu0 %v353
        %672 = vmatmul.mubr.f32.gmra.mrb[0].mxu0 %v352
        %v673 = vpop.f32.mrb[0].mxu0
        %v674 = vadd.f32 %v455, %v673
        %v675 = vpop.f32.mrb[0].mxu0
        %676 = vmatprep.mubr.f32.mxu0 %v355
        %677 = vmatmul.mubr.f32.gmra.mrb[0].mxu0 %v354
        %v678 = vpop.f32.mrb[0].mxu0
        %v679 = vadd.f32 %v455, %v678
        %v680 = vpop.f32.mrb[0].mxu0
        %681 = vmatprep.mubr.f32.mxu0 %v357
        %682 = vmatmul.mubr.f32.gmra.mrb[0].mxu0 %v356
        %v683 = vpop.f32.mrb[0].mxu0
        %v684 = vadd.f32 %v455, %v683
        %v685 = vpop.f32.mrb[0].mxu0
        %686 = vmatprep.mubr.f32.mxu0 %v359
        %687 = vmatmul.mubr.f32.gmra.mrb[0].mxu0 %v358
        %v688 = vpop.f32.mrb[0].mxu0
        %v689 = vadd.f32 %v455, %v688
        %v690 = vpop.f32.mrb[0].mxu0
        %691 = vmatprep.mubr.f32.mxu0 %v361
        %692 = vmatmul.mubr.f32.gmra.mrb[0].mxu0 %v360
        %v693 = vpop.f32.mrb[0].mxu0
        %v694 = vadd.f32 %v455, %v693
        %v695 = vpop.f32.mrb[0].mxu0
        %696 = vmatprep.mubr.f32.mxu0 %v363
        %697 = vmatmul.mubr.f32.gmra.mrb[0].mxu0 %v362
        %v698 = vpop.f32.mrb[0].mxu0
        %v699 = vadd.f32 %v455, %v698
        %v700 = vpop.f32.mrb[0].mxu0
        %701 = vmatprep.mubr.f32.mxu0 %v365
        %702 = vmatmul.mubr.f32.gmra.mrb[0].mxu0 %v364
        %v703 = vpop.f32.mrb[0].mxu0
        %v704 = vadd.f32 %v455, %v703
        %v705 = vpop.f32.mrb[0].mxu0
        %706 = vmatprep.mubr.f32.mxu0 %v367
        %707 = vmatmul.mubr.f32.gmra.mrb[0].mxu0 %v366
        %v708 = vpop.f32.mrb[0].mxu0
        %v709 = vadd.f32 %v455, %v708
        %v710 = vpop.f32.mrb[0].mxu0
        %711 = vmatprep.mubr.f32.mxu0 %v369
        %712 = vmatmul.mubr.f32.gmra.mrb[0].mxu0 %v368
        %v713 = vpop.f32.mrb[0].mxu0
        %v714 = vadd.f32 %v455, %v713
        %v715 = vpop.f32.mrb[0].mxu0
        %716 = vmatprep.mubr.f32.mxu0 %v371
        %717 = vmatmul.mubr.f32.gmra.mrb[0].mxu0 %v370
        %v718 = vpop.f32.mrb[0].mxu0
        %v719 = vadd.f32 %v455, %v718
        %v720 = vpop.f32.mrb[0].mxu0
        %721 = vmatprep.mubr.f32.mxu0 %v373
        %722 = vmatmul.mubr.f32.gmra.mrb[0].mxu0 %v372
        %v723 = vpop.f32.mrb[0].mxu0
        %v724 = vadd.f32 %v455, %v723
        %v725 = vpop.f32.mrb[0].mxu0
        %726 = vmatprep.mubr.f32.mxu0 %v375
        %727 = vmatmul.mubr.f32.gmra.mrb[0].mxu0 %v374
        %v728 = vpop.f32.mrb[0].mxu0
        %v729 = vadd.f32 %v455, %v728
        %v730 = vpop.f32.mrb[0].mxu0
        %731 = vmatprep.mubr.f32.mxu0 %v377
        %732 = vmatmul.mubr.f32.gmra.mrb[0].mxu0 %v376
        %v733 = vpop.f32.mrb[0].mxu0
        %v734 = vadd.f32 %v455, %v733
        %v735 = vpop.f32.mrb[0].mxu0
        %736 = vmatprep.mubr.f32.mxu0 %v379
        %737 = vmatmul.mubr.f32.gmra.mrb[0].mxu0 %v378
        %v738 = vpop.f32.mrb[0].mxu0
        %v739 = vadd.f32 %v455, %v738
        %v740 = vpop.f32.mrb[0].mxu0
        %741 = vmatprep.mubr.f32.mxu0 %v381
        %742 = vmatmul.mubr.f32.gmra.mrb[0].mxu0 %v380
        %v743 = vpop.f32.mrb[0].mxu0
        %v744 = vadd.f32 %v455, %v743
        %v745 = vpop.f32.mrb[0].mxu0
        %746 = vmatprep.mubr.f32.mxu0 %v383
        %747 = vmatmul.mubr.f32.gmra.mrb[0].mxu0 %v382
        %v748 = vpop.f32.mrb[0].mxu0
        %v749 = vadd.f32 %v455, %v748
        %v750 = vpop.f32.mrb[0].mxu0
        %751 = vmatprep.mubr.f32.mxu0 %v385
        %752 = vmatmul.mubr.f32.gmra.mrb[0].mxu0 %v384
        %v753 = vpop.f32.mrb[0].mxu0
        %v754 = vadd.f32 %v455, %v753
        %v755 = vpop.f32.mrb[0].mxu0
        %756 = vmatprep.mubr.f32.mxu0 %v387
        %757 = vmatmul.mubr.f32.gmra.mrb[0].mxu0 %v386
        %v758 = vpop.f32.mrb[0].mxu0
        %v759 = vadd.f32 %v455, %v758
        %v760 = vpop.f32.mrb[0].mxu0
        %761 = vmatprep.mubr.f32.mxu0 %v389
        %762 = vmatmul.mubr.f32.gmra.mrb[0].mxu0 %v388
        %v763 = vpop.f32.mrb[0].mxu0
        %v764 = vadd.f32 %v455, %v763
        %v765 = vpop.f32.mrb[0].mxu0
        %766 = vmatprep.mubr.f32.mxu0 %v391
        %767 = vmatmul.mubr.f32.gmra.mrb[0].mxu0 %v390
        %v768 = vpop.f32.mrb[0].mxu0
        %v769 = vadd.f32 %v455, %v768
        %v770 = vpop.f32.mrb[0].mxu0
        %771 = vmatprep.mubr.f32.mxu0 %v393
        %772 = vmatmul.mubr.f32.gmra.mrb[0].mxu0 %v392
        %v773 = vpop.f32.mrb[0].mxu0
        %v774 = vadd.f32 %v455, %v773
        %v775 = vpop.f32.mrb[0].mxu0
        %776 = vmatprep.mubr.f32.mxu0 %v395
        %777 = vmatmul.mubr.f32.gmra.mrb[0].mxu0 %v394
        %v778 = vpop.f32.mrb[0].mxu0
        %v779 = vadd.f32 %v455, %v778
        %v780 = vpop.f32.mrb[0].mxu0
        %781 = vmatprep.mubr.f32.mxu0 %v397
        %782 = vmatmul.mubr.f32.gmra.mrb[0].mxu0 %v396
        %v783 = vpop.f32.mrb[0].mxu0
        %v784 = vadd.f32 %v455, %v783
        %v785 = vpop.f32.mrb[0].mxu0
        %786 = vmatprep.mubr.f32.mxu0 %v399
        %787 = vmatmul.mubr.f32.gmra.mrb[0].mxu0 %v398
        %v788 = vpop.f32.mrb[0].mxu0
        %v789 = vadd.f32 %v455, %v788
        %v790 = vpop.f32.mrb[0].mxu0
        %791 = vmatprep.mubr.f32.mxu0 %v401
        %792 = vmatmul.mubr.f32.gmra.mrb[0].mxu0 %v400
        %v793 = vpop.f32.mrb[0].mxu0
        %v794 = vadd.f32 %v455, %v793
        %v795 = vpop.f32.mrb[0].mxu0
        %796 = vmatprep.mubr.f32.mxu0 %v403
        %797 = vmatmul.mubr.f32.gmra.mrb[0].mxu0 %v402
        %v798 = vpop.f32.mrb[0].mxu0
        %v799 = vadd.f32 %v455, %v798
        %v800 = vpop.f32.mrb[0].mxu0
        %801 = vmatprep.mubr.f32.mxu0 %v405
        %802 = vmatmul.mubr.f32.gmra.mrb[0].mxu0 %v404
        %v803 = vpop.f32.mrb[0].mxu0
        %v804 = vadd.f32 %v455, %v803
        %v805 = vpop.f32.mrb[0].mxu0
        %806 = vmatprep.mubr.f32.mxu0 %v407
        %807 = vmatmul.mubr.f32.gmra.mrb[0].mxu0 %v406
        %v808 = vpop.f32.mrb[0].mxu0
        %v809 = vadd.f32 %v455, %v808
        %v810 = vpop.f32.mrb[0].mxu0
        %811 = vmatprep.mubr.f32.mxu0 %v409
        %812 = vmatmul.mubr.f32.gmra.mrb[0].mxu0 %v408
        %v813 = vpop.f32.mrb[0].mxu0
        %v814 = vadd.f32 %v455, %v813
        %v815 = vpop.f32.mrb[0].mxu0
        %816 = vmatprep.mubr.f32.mxu0 %v411
        %817 = vmatmul.mubr.f32.gmra.mrb[0].mxu0 %v410
        %v818 = vpop.f32.mrb[0].mxu0
        %v819 = vadd.f32 %v455, %v818
        %v820 = vpop.f32.mrb[0].mxu0
        %821 = vmatprep.mubr.f32.mxu0 %v413
        %822 = vmatmul.mubr.f32.gmra.mrb[0].mxu0 %v412
        %v823 = vpop.f32.mrb[0].mxu0
        %v824 = vadd.f32 %v455, %v823
        %v825 = vpop.f32.mrb[0].mxu0
        %826 = vmatprep.mubr.f32.mxu0 %v415
        %827 = vmatmul.mubr.f32.gmra.mrb[0].mxu0 %v414
        %v828 = vpop.f32.mrb[0].mxu0
        %v829 = vadd.f32 %v455, %v828
        %v830 = vpop.f32.mrb[0].mxu0
        %831 = vmatprep.mubr.f32.mxu0 %v417
        %832 = vmatmul.mubr.f32.gmra.mrb[0].mxu0 %v416
        %v833 = vpop.f32.mrb[0].mxu0
        %v834 = vadd.f32 %v455, %v833
        %v835 = vpop.f32.mrb[0].mxu0
        %836 = vdwg.mxu0
        %v837 = vmax.f32 %v524, 0.0
        %v838 = vmax.f32 %v529, 0.0
        %v839 = vmax.f32 %v534, 0.0
        %v840 = vmax.f32 %v539, 0.0
        %v841 = vmax.f32 %v544, 0.0
        %v842 = vmax.f32 %v549, 0.0
        %v843 = vmax.f32 %v554, 0.0
        %v844 = vmax.f32 %v559, 0.0
        %v845 = vmax.f32 %v564, 0.0
        %v846 = vmax.f32 %v569, 0.0
        %v847 = vmax.f32 %v574, 0.0
        %v848 = vmax.f32 %v579, 0.0
        %v849 = vmax.f32 %v584, 0.0
        %v850 = vmax.f32 %v589, 0.0
        %v851 = vmax.f32 %v594, 0.0
        %v852 = vmax.f32 %v599, 0.0
        %v853 = vmax.f32 %v604, 0.0
        %v854 = vmax.f32 %v609, 0.0
        %v855 = vmax.f32 %v614, 0.0
        %v856 = vmax.f32 %v619, 0.0
        %v857 = vmax.f32 %v624, 0.0
        %v858 = vmax.f32 %v629, 0.0
        %v859 = vmax.f32 %v634, 0.0
        %v860 = vmax.f32 %v639, 0.0
        %v861 = vmax.f32 %v644, 0.0
        %v862 = vmax.f32 %v649, 0.0
        %v863 = vmax.f32 %v654, 0.0
        %v864 = vmax.f32 %v659, 0.0
        %v865 = vmax.f32 %v664, 0.0
        %v866 = vmax.f32 %v669, 0.0
        %v867 = vmax.f32 %v674, 0.0
        %v868 = vmax.f32 %v679, 0.0
        %v869 = vmax.f32 %v684, 0.0
        %v870 = vmax.f32 %v689, 0.0
        %v871 = vmax.f32 %v694, 0.0
        %v872 = vmax.f32 %v699, 0.0
        %v873 = vmax.f32 %v704, 0.0
        %v874 = vmax.f32 %v709, 0.0
        %v875 = vmax.f32 %v714, 0.0
        %v876 = vmax.f32 %v719, 0.0
        %v877 = vmax.f32 %v724, 0.0
        %v878 = vmax.f32 %v729, 0.0
        %v879 = vmax.f32 %v734, 0.0
        %v880 = vmax.f32 %v739, 0.0
        %v881 = vmax.f32 %v744, 0.0
        %v882 = vmax.f32 %v749, 0.0
        %v883 = vmax.f32 %v754, 0.0
        %v884 = vmax.f32 %v759, 0.0
        %v885 = vmax.f32 %v764, 0.0
        %v886 = vmax.f32 %v769, 0.0
        %v887 = vmax.f32 %v774, 0.0
        %v888 = vmax.f32 %v779, 0.0
        %v889 = vmax.f32 %v784, 0.0
        %v890 = vmax.f32 %v789, 0.0
        %v891 = vmax.f32 %v794, 0.0
        %v892 = vmax.f32 %v799, 0.0
        %v893 = vmax.f32 %v804, 0.0
        %v894 = vmax.f32 %v809, 0.0
        %v895 = vmax.f32 %v814, 0.0
        %v896 = vmax.f32 %v819, 0.0
        %v897 = vmax.f32 %v824, 0.0
        %v898 = vmax.f32 %v829, 0.0
        %v899 = vmax.f32 %v834, 0.0
        %v900 = vld [vmem:[#allocation7] sm:$0xff]
        %v901 = vld [vmem:[#allocation7 + $0x8] sm:$0xff]
        %v902 = vld [vmem:[#allocation7 + $0x10] sm:$0xff]
        %v903 = vld [vmem:[#allocation7 + $0x18] sm:$0xff]
        %v904 = vld [vmem:[#allocation7 + $0x20] sm:$0xff]
        %v905 = vld [vmem:[#allocation7 + $0x28] sm:$0xff]
        %v906 = vld [vmem:[#allocation7 + $0x30] sm:$0xff]
        %v907 = vld [vmem:[#allocation7 + $0x38] sm:$0xff]
        %v908 = vld [vmem:[#allocation7 + $0x40] sm:$0xff]
        %v909 = vld [vmem:[#allocation7 + $0x48] sm:$0xff]
        %v910 = vld [vmem:[#allocation7 + $0x50] sm:$0xff]
        %v911 = vld [vmem:[#allocation7 + $0x58] sm:$0xff]
        %v912 = vld [vmem:[#allocation7 + $0x60] sm:$0xff]
        %v913 = vld [vmem:[#allocation7 + $0x68] sm:$0xff]
        %v914 = vld [vmem:[#allocation7 + $0x70] sm:$0xff]
        %v915 = vld [vmem:[#allocation7 + $0x78] sm:$0xff]
        %v916 = vld [vmem:[#allocation7 + $0x80] sm:$0xff]
        %v917 = vld [vmem:[#allocation7 + $0x88] sm:$0xff]
        %v918 = vld [vmem:[#allocation7 + $0x90] sm:$0xff]
        %v919 = vld [vmem:[#allocation7 + $0x98] sm:$0xff]
        %v920 = vld [vmem:[#allocation7 + $0xa0] sm:$0xff]
        %v921 = vld [vmem:[#allocation7 + $0xa8] sm:$0xff]
        %v922 = vld [vmem:[#allocation7 + $0xb0] sm:$0xff]
        %v923 = vld [vmem:[#allocation7 + $0xb8] sm:$0xff]
        %v924 = vld [vmem:[#allocation7 + $0xc0] sm:$0xff]
        %v925 = vld [vmem:[#allocation7 + $0xc8] sm:$0xff]
        %v926 = vld [vmem:[#allocation7 + $0xd0] sm:$0xff]
        %v927 = vld [vmem:[#allocation7 + $0xd8] sm:$0xff]
        %v928 = vld [vmem:[#allocation7 + $0xe0] sm:$0xff]
        %v929 = vld [vmem:[#allocation7 + $0xe8] sm:$0xff]
        %v930 = vld [vmem:[#allocation7 + $0xf0] sm:$0xff]
        %v931 = vld [vmem:[#allocation7 + $0xf8] sm:$0xff]
        %v932 = vld [vmem:[%s4] sm:$0x3]
        %v934 = vlaneseq
        %v935 = vshrl.u32 %v934, 7
        %v936 = vsub.s32 0, %v935
        %v937 = vrot.slane %v932, %v936
        %v938 = vlaneseq
        %v939 = vshrl.u32 %v938, 7
        %v940 = vsub.s32 1, %v939
        %v941 = vrot.slane %v932, %v940
        %944 = vmatprep.subr.mxu0 %v901
        %945 = vmatpush1.msra.mxu0 %v900
        %946 = vmatprep.subr.mxu0 %v903
        %947 = vmatpush1.msra.mxu0 %v902
        %948 = vmatprep.subr.mxu0 %v905
        %949 = vmatpush1.msra.mxu0 %v904
        %950 = vmatprep.subr.mxu0 %v907
        %951 = vmatpush1.msra.mxu0 %v906
        %952 = vmatprep.subr.mxu0 %v909
        %953 = vmatpush1.msra.mxu0 %v908
        %954 = vmatprep.subr.mxu0 %v911
        %955 = vmatpush1.msra.mxu0 %v910
        %956 = vmatprep.subr.mxu0 %v913
        %957 = vmatpush1.msra.mxu0 %v912
        %958 = vmatprep.subr.mxu0 %v915
        %959 = vmatpush1.msra.mxu0 %v914
        %960 = vmatprep.subr.mxu0 %v917
        %961 = vmatpush1.msra.mxu0 %v916
        %962 = vmatprep.subr.mxu0 %v919
        %963 = vmatpush1.msra.mxu0 %v918
        %964 = vmatprep.subr.mxu0 %v921
        %965 = vmatpush1.msra.mxu0 %v920
        %966 = vmatprep.subr.mxu0 %v923
        %967 = vmatpush1.msra.mxu0 %v922
        %968 = vmatprep.subr.mxu0 %v925
        %969 = vmatpush1.msra.mxu0 %v924
        %970 = vmatprep.subr.mxu0 %v927
        %971 = vmatpush1.msra.mxu0 %v926
        %972 = vmatprep.subr.mxu0 %v929
        %973 = vmatpush1.msra.mxu0 %v928
        %974 = vmatprep.subr.mxu0 %v931
        %975 = vmatpush1.msra.mxu0 %v930
        %976 = vmatprep.subr.mxu0 0.0
        %977 = vmatpush1.msra.mxu0 0.0
        %978 = vmatprep.subr.mxu0 0.0
        %979 = vmatpush1.msra.mxu0 0.0
        %980 = vmatprep.subr.mxu0 0.0
        %981 = vmatpush1.msra.mxu0 0.0
        %982 = vmatprep.subr.mxu0 0.0
        %983 = vmatpush1.msra.mxu0 0.0
        %984 = vmatprep.subr.mxu0 0.0
        %985 = vmatpush1.msra.mxu0 0.0
        %986 = vmatprep.subr.mxu0 0.0
        %987 = vmatpush1.msra.mxu0 0.0
        %988 = vmatprep.subr.mxu0 0.0
        %989 = vmatpush1.msra.mxu0 0.0
        %990 = vmatprep.subr.mxu0 0.0
        %991 = vmatpush1.msra.mxu0 0.0
        %992 = vmatprep.subr.mxu0 0.0
        %993 = vmatpush1.msra.mxu0 0.0
        %994 = vmatprep.subr.mxu0 0.0
        %995 = vmatpush1.msra.mxu0 0.0
        %996 = vmatprep.subr.mxu0 0.0
        %997 = vmatpush1.msra.mxu0 0.0
        %998 = vmatprep.subr.mxu0 0.0
        %999 = vmatpush1.msra.mxu0 0.0
        %1000 = vmatprep.subr.mxu0 0.0
        %1001 = vmatpush1.msra.mxu0 0.0
        %1002 = vmatprep.subr.mxu0 0.0
        %1003 = vmatpush1.msra.mxu0 0.0
        %1004 = vmatprep.subr.mxu0 0.0
        %1005 = vmatpush1.msra.mxu0 0.0
        %1006 = vmatprep.subr.mxu0 0.0
        %1007 = vmatpush1.msra.mxu0 0.0
        %1008 = vmatprep.mubr.f32.mxu0 0.0
        %1009 = vmatmul.mubr.f32.gmra.mrb[0].mxu0 %v837
        %v1010 = vpop.f32.mrb[0].mxu0
        %v1011 = vadd.f32 %v937, %v1010
        %v1012 = vpop.f32.mrb[0].mxu0
        %v1013 = vadd.f32 %v941, %v1012
        %1014 = vmatprep.mubr.f32.mxu0 0.0
        %1015 = vmatmul.mubr.f32.gmra.mrb[0].mxu0 %v838
        %v1016 = vpop.f32.mrb[0].mxu0
        %v1017 = vadd.f32 %v937, %v1016
        %v1018 = vpop.f32.mrb[0].mxu0
        %v1019 = vadd.f32 %v941, %v1018
        %1020 = vmatprep.mubr.f32.mxu0 0.0
        %1021 = vmatmul.mubr.f32.gmra.mrb[0].mxu0 %v839
        %v1022 = vpop.f32.mrb[0].mxu0
        %v1023 = vadd.f32 %v937, %v1022
        %v1024 = vpop.f32.mrb[0].mxu0
        %v1025 = vadd.f32 %v941, %v1024
        %1026 = vmatprep.mubr.f32.mxu0 0.0
        %1027 = vmatmul.mubr.f32.gmra.mrb[0].mxu0 %v840
        %v1028 = vpop.f32.mrb[0].mxu0
        %v1029 = vadd.f32 %v937, %v1028
        %v1030 = vpop.f32.mrb[0].mxu0
        %v1031 = vadd.f32 %v941, %v1030
        %1032 = vmatprep.mubr.f32.mxu0 0.0
        %1033 = vmatmul.mubr.f32.gmra.mrb[0].mxu0 %v841
        %v1034 = vpop.f32.mrb[0].mxu0
        %v1035 = vadd.f32 %v937, %v1034
        %v1036 = vpop.f32.mrb[0].mxu0
        %v1037 = vadd.f32 %v941, %v1036
        %1038 = vmatprep.mubr.f32.mxu0 0.0
        %1039 = vmatmul.mubr.f32.gmra.mrb[0].mxu0 %v842
        %v1040 = vpop.f32.mrb[0].mxu0
        %v1041 = vadd.f32 %v937, %v1040
        %v1042 = vpop.f32.mrb[0].mxu0
        %v1043 = vadd.f32 %v941, %v1042
        %1044 = vmatprep.mubr.f32.mxu0 0.0
        %1045 = vmatmul.mubr.f32.gmra.mrb[0].mxu0 %v843
        %v1046 = vpop.f32.mrb[0].mxu0
        %v1047 = vadd.f32 %v937, %v1046
        %v1048 = vpop.f32.mrb[0].mxu0
        %v1049 = vadd.f32 %v941, %v1048
        %1050 = vmatprep.mubr.f32.mxu0 0.0
        %1051 = vmatmul.mubr.f32.gmra.mrb[0].mxu0 %v844
        %v1052 = vpop.f32.mrb[0].mxu0
        %v1053 = vadd.f32 %v937, %v1052
        %v1054 = vpop.f32.mrb[0].mxu0
        %v1055 = vadd.f32 %v941, %v1054
        %1056 = vmatprep.mubr.f32.mxu0 0.0
        %1057 = vmatmul.mubr.f32.gmra.mrb[0].mxu0 %v845
        %v1058 = vpop.f32.mrb[0].mxu0
        %v1059 = vadd.f32 %v937, %v1058
        %v1060 = vpop.f32.mrb[0].mxu0
        %v1061 = vadd.f32 %v941, %v1060
        %1062 = vmatprep.mubr.f32.mxu0 0.0
        %1063 = vmatmul.mubr.f32.gmra.mrb[0].mxu0 %v846
        %v1064 = vpop.f32.mrb[0].mxu0
        %v1065 = vadd.f32 %v937, %v1064
        %v1066 = vpop.f32.mrb[0].mxu0
        %v1067 = vadd.f32 %v941, %v1066
        %1068 = vmatprep.mubr.f32.mxu0 0.0
        %1069 = vmatmul.mubr.f32.gmra.mrb[0].mxu0 %v847
        %v1070 = vpop.f32.mrb[0].mxu0
        %v1071 = vadd.f32 %v937, %v1070
        %v1072 = vpop.f32.mrb[0].mxu0
        %v1073 = vadd.f32 %v941, %v1072
        %1074 = vmatprep.mubr.f32.mxu0 0.0
        %1075 = vmatmul.mubr.f32.gmra.mrb[0].mxu0 %v848
        %v1076 = vpop.f32.mrb[0].mxu0
        %v1077 = vadd.f32 %v937, %v1076
        %v1078 = vpop.f32.mrb[0].mxu0
        %v1079 = vadd.f32 %v941, %v1078
        %1080 = vmatprep.mubr.f32.mxu0 0.0
        %1081 = vmatmul.mubr.f32.gmra.mrb[0].mxu0 %v849
        %v1082 = vpop.f32.mrb[0].mxu0
        %v1083 = vadd.f32 %v937, %v1082
        %v1084 = vpop.f32.mrb[0].mxu0
        %v1085 = vadd.f32 %v941, %v1084
        %1086 = vmatprep.mubr.f32.mxu0 0.0
        %1087 = vmatmul.mubr.f32.gmra.mrb[0].mxu0 %v850
        %v1088 = vpop.f32.mrb[0].mxu0
        %v1089 = vadd.f32 %v937, %v1088
        %v1090 = vpop.f32.mrb[0].mxu0
        %v1091 = vadd.f32 %v941, %v1090
        %1092 = vmatprep.mubr.f32.mxu0 0.0
        %1093 = vmatmul.mubr.f32.gmra.mrb[0].mxu0 %v851
        %v1094 = vpop.f32.mrb[0].mxu0
        %v1095 = vadd.f32 %v937, %v1094
        %v1096 = vpop.f32.mrb[0].mxu0
        %v1097 = vadd.f32 %v941, %v1096
        %1098 = vmatprep.mubr.f32.mxu0 0.0
        %1099 = vmatmul.mubr.f32.gmra.mrb[0].mxu0 %v852
        %v1100 = vpop.f32.mrb[0].mxu0
        %v1101 = vadd.f32 %v937, %v1100
        %v1102 = vpop.f32.mrb[0].mxu0
        %v1103 = vadd.f32 %v941, %v1102
        %1104 = vmatprep.mubr.f32.mxu0 0.0
        %1105 = vmatmul.mubr.f32.gmra.mrb[0].mxu0 %v853
        %v1106 = vpop.f32.mrb[0].mxu0
        %v1107 = vadd.f32 %v937, %v1106
        %v1108 = vpop.f32.mrb[0].mxu0
        %v1109 = vadd.f32 %v941, %v1108
        %1110 = vmatprep.mubr.f32.mxu0 0.0
        %1111 = vmatmul.mubr.f32.gmra.mrb[0].mxu0 %v854
        %v1112 = vpop.f32.mrb[0].mxu0
        %v1113 = vadd.f32 %v937, %v1112
        %v1114 = vpop.f32.mrb[0].mxu0
        %v1115 = vadd.f32 %v941, %v1114
        %1116 = vmatprep.mubr.f32.mxu0 0.0
        %1117 = vmatmul.mubr.f32.gmra.mrb[0].mxu0 %v855
        %v1118 = vpop.f32.mrb[0].mxu0
        %v1119 = vadd.f32 %v937, %v1118
        %v1120 = vpop.f32.mrb[0].mxu0
        %v1121 = vadd.f32 %v941, %v1120
        %1122 = vmatprep.mubr.f32.mxu0 0.0
        %1123 = vmatmul.mubr.f32.gmra.mrb[0].mxu0 %v856
        %v1124 = vpop.f32.mrb[0].mxu0
        %v1125 = vadd.f32 %v937, %v1124
        %v1126 = vpop.f32.mrb[0].mxu0
        %v1127 = vadd.f32 %v941, %v1126
        %1128 = vmatprep.mubr.f32.mxu0 0.0
        %1129 = vmatmul.mubr.f32.gmra.mrb[0].mxu0 %v857
        %v1130 = vpop.f32.mrb[0].mxu0
        %v1131 = vadd.f32 %v937, %v1130
        %v1132 = vpop.f32.mrb[0].mxu0
        %v1133 = vadd.f32 %v941, %v1132
        %1134 = vmatprep.mubr.f32.mxu0 0.0
        %1135 = vmatmul.mubr.f32.gmra.mrb[0].mxu0 %v858
        %v1136 = vpop.f32.mrb[0].mxu0
        %v1137 = vadd.f32 %v937, %v1136
        %v1138 = vpop.f32.mrb[0].mxu0
        %v1139 = vadd.f32 %v941, %v1138
        %1140 = vmatprep.mubr.f32.mxu0 0.0
        %1141 = vmatmul.mubr.f32.gmra.mrb[0].mxu0 %v859
        %v1142 = vpop.f32.mrb[0].mxu0
        %v1143 = vadd.f32 %v937, %v1142
        %v1144 = vpop.f32.mrb[0].mxu0
        %v1145 = vadd.f32 %v941, %v1144
        %1146 = vmatprep.mubr.f32.mxu0 0.0
        %1147 = vmatmul.mubr.f32.gmra.mrb[0].mxu0 %v860
        %v1148 = vpop.f32.mrb[0].mxu0
        %v1149 = vadd.f32 %v937, %v1148
        %v1150 = vpop.f32.mrb[0].mxu0
        %v1151 = vadd.f32 %v941, %v1150
        %1152 = vmatprep.mubr.f32.mxu0 0.0
        %1153 = vmatmul.mubr.f32.gmra.mrb[0].mxu0 %v861
        %v1154 = vpop.f32.mrb[0].mxu0
        %v1155 = vadd.f32 %v937, %v1154
        %v1156 = vpop.f32.mrb[0].mxu0
        %v1157 = vadd.f32 %v941, %v1156
        %1158 = vmatprep.mubr.f32.mxu0 0.0
        %1159 = vmatmul.mubr.f32.gmra.mrb[0].mxu0 %v862
        %v1160 = vpop.f32.mrb[0].mxu0
        %v1161 = vadd.f32 %v937, %v1160
        %v1162 = vpop.f32.mrb[0].mxu0
        %v1163 = vadd.f32 %v941, %v1162
        %1164 = vmatprep.mubr.f32.mxu0 0.0
        %1165 = vmatmul.mubr.f32.gmra.mrb[0].mxu0 %v863
        %v1166 = vpop.f32.mrb[0].mxu0
        %v1167 = vadd.f32 %v937, %v1166
        %v1168 = vpop.f32.mrb[0].mxu0
        %v1169 = vadd.f32 %v941, %v1168
        %1170 = vmatprep.mubr.f32.mxu0 0.0
        %1171 = vmatmul.mubr.f32.gmra.mrb[0].mxu0 %v864
        %v1172 = vpop.f32.mrb[0].mxu0
        %v1173 = vadd.f32 %v937, %v1172
        %v1174 = vpop.f32.mrb[0].mxu0
        %v1175 = vadd.f32 %v941, %v1174
        %1176 = vmatprep.mubr.f32.mxu0 0.0
        %1177 = vmatmul.mubr.f32.gmra.mrb[0].mxu0 %v865
        %v1178 = vpop.f32.mrb[0].mxu0
        %v1179 = vadd.f32 %v937, %v1178
        %v1180 = vpop.f32.mrb[0].mxu0
        %v1181 = vadd.f32 %v941, %v1180
        %1182 = vmatprep.mubr.f32.mxu0 0.0
        %1183 = vmatmul.mubr.f32.gmra.mrb[0].mxu0 %v866
        %v1184 = vpop.f32.mrb[0].mxu0
        %v1185 = vadd.f32 %v937, %v1184
        %v1186 = vpop.f32.mrb[0].mxu0
        %v1187 = vadd.f32 %v941, %v1186
        %1188 = vmatprep.mubr.f32.mxu0 0.0
        %1189 = vmatmul.mubr.f32.gmra.mrb[0].mxu0 %v867
        %v1190 = vpop.f32.mrb[0].mxu0
        %v1191 = vadd.f32 %v937, %v1190
        %v1192 = vpop.f32.mrb[0].mxu0
        %v1193 = vadd.f32 %v941, %v1192
        %1194 = vmatprep.mubr.f32.mxu0 0.0
        %1195 = vmatmul.mubr.f32.gmra.mrb[0].mxu0 %v868
        %v1196 = vpop.f32.mrb[0].mxu0
        %v1197 = vadd.f32 %v937, %v1196
        %v1198 = vpop.f32.mrb[0].mxu0
        %v1199 = vadd.f32 %v941, %v1198
        %1200 = vmatprep.mubr.f32.mxu0 0.0
        %1201 = vmatmul.mubr.f32.gmra.mrb[0].mxu0 %v869
        %v1202 = vpop.f32.mrb[0].mxu0
        %v1203 = vadd.f32 %v937, %v1202
        %v1204 = vpop.f32.mrb[0].mxu0
        %v1205 = vadd.f32 %v941, %v1204
        %1206 = vmatprep.mubr.f32.mxu0 0.0
        %1207 = vmatmul.mubr.f32.gmra.mrb[0].mxu0 %v870
        %v1208 = vpop.f32.mrb[0].mxu0
        %v1209 = vadd.f32 %v937, %v1208
        %v1210 = vpop.f32.mrb[0].mxu0
        %v1211 = vadd.f32 %v941, %v1210
        %1212 = vmatprep.mubr.f32.mxu0 0.0
        %1213 = vmatmul.mubr.f32.gmra.mrb[0].mxu0 %v871
        %v1214 = vpop.f32.mrb[0].mxu0
        %v1215 = vadd.f32 %v937, %v1214
        %v1216 = vpop.f32.mrb[0].mxu0
        %v1217 = vadd.f32 %v941, %v1216
        %1218 = vmatprep.mubr.f32.mxu0 0.0
        %1219 = vmatmul.mubr.f32.gmra.mrb[0].mxu0 %v872
        %v1220 = vpop.f32.mrb[0].mxu0
        %v1221 = vadd.f32 %v937, %v1220
        %v1222 = vpop.f32.mrb[0].mxu0
        %v1223 = vadd.f32 %v941, %v1222
        %1224 = vmatprep.mubr.f32.mxu0 0.0
        %1225 = vmatmul.mubr.f32.gmra.mrb[0].mxu0 %v873
        %v1226 = vpop.f32.mrb[0].mxu0
        %v1227 = vadd.f32 %v937, %v1226
        %v1228 = vpop.f32.mrb[0].mxu0
        %v1229 = vadd.f32 %v941, %v1228
        %1230 = vmatprep.mubr.f32.mxu0 0.0
        %1231 = vmatmul.mubr.f32.gmra.mrb[0].mxu0 %v874
        %v1232 = vpop.f32.mrb[0].mxu0
        %v1233 = vadd.f32 %v937, %v1232
        %v1234 = vpop.f32.mrb[0].mxu0
        %v1235 = vadd.f32 %v941, %v1234
        %1236 = vmatprep.mubr.f32.mxu0 0.0
        %1237 = vmatmul.mubr.f32.gmra.mrb[0].mxu0 %v875
        %v1238 = vpop.f32.mrb[0].mxu0
        %v1239 = vadd.f32 %v937, %v1238
        %v1240 = vpop.f32.mrb[0].mxu0
        %v1241 = vadd.f32 %v941, %v1240
        %1242 = vmatprep.mubr.f32.mxu0 0.0
        %1243 = vmatmul.mubr.f32.gmra.mrb[0].mxu0 %v876
        %v1244 = vpop.f32.mrb[0].mxu0
        %v1245 = vadd.f32 %v937, %v1244
        %v1246 = vpop.f32.mrb[0].mxu0
        %v1247 = vadd.f32 %v941, %v1246
        %1248 = vmatprep.mubr.f32.mxu0 0.0
        %1249 = vmatmul.mubr.f32.gmra.mrb[0].mxu0 %v877
        %v1250 = vpop.f32.mrb[0].mxu0
        %v1251 = vadd.f32 %v937, %v1250
        %v1252 = vpop.f32.mrb[0].mxu0
        %v1253 = vadd.f32 %v941, %v1252
        %1254 = vmatprep.mubr.f32.mxu0 0.0
        %1255 = vmatmul.mubr.f32.gmra.mrb[0].mxu0 %v878
        %v1256 = vpop.f32.mrb[0].mxu0
        %v1257 = vadd.f32 %v937, %v1256
        %v1258 = vpop.f32.mrb[0].mxu0
        %v1259 = vadd.f32 %v941, %v1258
        %1260 = vmatprep.mubr.f32.mxu0 0.0
        %1261 = vmatmul.mubr.f32.gmra.mrb[0].mxu0 %v879
        %v1262 = vpop.f32.mrb[0].mxu0
        %v1263 = vadd.f32 %v937, %v1262
        %v1264 = vpop.f32.mrb[0].mxu0
        %v1265 = vadd.f32 %v941, %v1264
        %1266 = vmatprep.mubr.f32.mxu0 0.0
        %1267 = vmatmul.mubr.f32.gmra.mrb[0].mxu0 %v880
        %v1268 = vpop.f32.mrb[0].mxu0
        %v1269 = vadd.f32 %v937, %v1268
        %v1270 = vpop.f32.mrb[0].mxu0
        %v1271 = vadd.f32 %v941, %v1270
        %1272 = vmatprep.mubr.f32.mxu0 0.0
        %1273 = vmatmul.mubr.f32.gmra.mrb[0].mxu0 %v881
        %v1274 = vpop.f32.mrb[0].mxu0
        %v1275 = vadd.f32 %v937, %v1274
        %v1276 = vpop.f32.mrb[0].mxu0
        %v1277 = vadd.f32 %v941, %v1276
        %1278 = vmatprep.mubr.f32.mxu0 0.0
        %1279 = vmatmul.mubr.f32.gmra.mrb[0].mxu0 %v882
        %v1280 = vpop.f32.mrb[0].mxu0
        %v1281 = vadd.f32 %v937, %v1280
        %v1282 = vpop.f32.mrb[0].mxu0
        %v1283 = vadd.f32 %v941, %v1282
        %1284 = vmatprep.mubr.f32.mxu0 0.0
        %1285 = vmatmul.mubr.f32.gmra.mrb[0].mxu0 %v883
        %v1286 = vpop.f32.mrb[0].mxu0
        %v1287 = vadd.f32 %v937, %v1286
        %v1288 = vpop.f32.mrb[0].mxu0
        %v1289 = vadd.f32 %v941, %v1288
        %1290 = vmatprep.mubr.f32.mxu0 0.0
        %1291 = vmatmul.mubr.f32.gmra.mrb[0].mxu0 %v884
        %v1292 = vpop.f32.mrb[0].mxu0
        %v1293 = vadd.f32 %v937, %v1292
        %v1294 = vpop.f32.mrb[0].mxu0
        %v1295 = vadd.f32 %v941, %v1294
        %1296 = vmatprep.mubr.f32.mxu0 0.0
        %1297 = vmatmul.mubr.f32.gmra.mrb[0].mxu0 %v885
        %v1298 = vpop.f32.mrb[0].mxu0
        %v1299 = vadd.f32 %v937, %v1298
        %v1300 = vpop.f32.mrb[0].mxu0
        %v1301 = vadd.f32 %v941, %v1300
        %1302 = vmatprep.mubr.f32.mxu0 0.0
        %1303 = vmatmul.mubr.f32.gmra.mrb[0].mxu0 %v886
        %v1304 = vpop.f32.mrb[0].mxu0
        %v1305 = vadd.f32 %v937, %v1304
        %v1306 = vpop.f32.mrb[0].mxu0
        %v1307 = vadd.f32 %v941, %v1306
        %1308 = vmatprep.mubr.f32.mxu0 0.0
        %1309 = vmatmul.mubr.f32.gmra.mrb[0].mxu0 %v887
        %v1310 = vpop.f32.mrb[0].mxu0
        %v1311 = vadd.f32 %v937, %v1310
        %v1312 = vpop.f32.mrb[0].mxu0
        %v1313 = vadd.f32 %v941, %v1312
        %1314 = vmatprep.mubr.f32.mxu0 0.0
        %1315 = vmatmul.mubr.f32.gmra.mrb[0].mxu0 %v888
        %v1316 = vpop.f32.mrb[0].mxu0
        %v1317 = vadd.f32 %v937, %v1316
        %v1318 = vpop.f32.mrb[0].mxu0
        %v1319 = vadd.f32 %v941, %v1318
        %1320 = vmatprep.mubr.f32.mxu0 0.0
        %1321 = vmatmul.mubr.f32.gmra.mrb[0].mxu0 %v889
        %v1322 = vpop.f32.mrb[0].mxu0
        %v1323 = vadd.f32 %v937, %v1322
        %v1324 = vpop.f32.mrb[0].mxu0
        %v1325 = vadd.f32 %v941, %v1324
        %1326 = vmatprep.mubr.f32.mxu0 0.0
        %1327 = vmatmul.mubr.f32.gmra.mrb[0].mxu0 %v890
        %v1328 = vpop.f32.mrb[0].mxu0
        %v1329 = vadd.f32 %v937, %v1328
        %v1330 = vpop.f32.mrb[0].mxu0
        %v1331 = vadd.f32 %v941, %v1330
        %1332 = vmatprep.mubr.f32.mxu0 0.0
        %1333 = vmatmul.mubr.f32.gmra.mrb[0].mxu0 %v891
        %v1334 = vpop.f32.mrb[0].mxu0
        %v1335 = vadd.f32 %v937, %v1334
        %v1336 = vpop.f32.mrb[0].mxu0
        %v1337 = vadd.f32 %v941, %v1336
        %1338 = vmatprep.mubr.f32.mxu0 0.0
        %1339 = vmatmul.mubr.f32.gmra.mrb[0].mxu0 %v892
        %v1340 = vpop.f32.mrb[0].mxu0
        %v1341 = vadd.f32 %v937, %v1340
        %v1342 = vpop.f32.mrb[0].mxu0
        %v1343 = vadd.f32 %v941, %v1342
        %1344 = vmatprep.mubr.f32.mxu0 0.0
        %1345 = vmatmul.mubr.f32.gmra.mrb[0].mxu0 %v893
        %v1346 = vpop.f32.mrb[0].mxu0
        %v1347 = vadd.f32 %v937, %v1346
        %v1348 = vpop.f32.mrb[0].mxu0
        %v1349 = vadd.f32 %v941, %v1348
        %1350 = vmatprep.mubr.f32.mxu0 0.0
        %1351 = vmatmul.mubr.f32.gmra.mrb[0].mxu0 %v894
        %v1352 = vpop.f32.mrb[0].mxu0
        %v1353 = vadd.f32 %v937, %v1352
        %v1354 = vpop.f32.mrb[0].mxu0
        %v1355 = vadd.f32 %v941, %v1354
        %1356 = vmatprep.mubr.f32.mxu0 0.0
        %1357 = vmatmul.mubr.f32.gmra.mrb[0].mxu0 %v895
        %v1358 = vpop.f32.mrb[0].mxu0
        %v1359 = vadd.f32 %v937, %v1358
        %v1360 = vpop.f32.mrb[0].mxu0
        %v1361 = vadd.f32 %v941, %v1360
        %1362 = vmatprep.mubr.f32.mxu0 0.0
        %1363 = vmatmul.mubr.f32.gmra.mrb[0].mxu0 %v896
        %v1364 = vpop.f32.mrb[0].mxu0
        %v1365 = vadd.f32 %v937, %v1364
        %v1366 = vpop.f32.mrb[0].mxu0
        %v1367 = vadd.f32 %v941, %v1366
        %1368 = vmatprep.mubr.f32.mxu0 0.0
        %1369 = vmatmul.mubr.f32.gmra.mrb[0].mxu0 %v897
        %v1370 = vpop.f32.mrb[0].mxu0
        %v1371 = vadd.f32 %v937, %v1370
        %v1372 = vpop.f32.mrb[0].mxu0
        %v1373 = vadd.f32 %v941, %v1372
        %1374 = vmatprep.mubr.f32.mxu0 0.0
        %1375 = vmatmul.mubr.f32.gmra.mrb[0].mxu0 %v898
        %v1376 = vpop.f32.mrb[0].mxu0
        %v1377 = vadd.f32 %v937, %v1376
        %v1378 = vpop.f32.mrb[0].mxu0
        %v1379 = vadd.f32 %v941, %v1378
        %1380 = vmatprep.mubr.f32.mxu0 0.0
        %1381 = vmatmul.mubr.f32.gmra.mrb[0].mxu0 %v899
        %v1382 = vpop.f32.mrb[0].mxu0
        %v1383 = vadd.f32 %v937, %v1382
        %v1384 = vpop.f32.mrb[0].mxu0
        %v1385 = vadd.f32 %v941, %v1384
        %1386 = vdwg.mxu0
        %1387 = vst [vmem:[%s279] sm:$0xff] %v1011
        %1388 = vst [vmem:[%s279 + $0x8] sm:$0xff] %v1013
        %1389 = vst [vmem:[%s279 + $0x10] sm:$0xff] %v1017
        %1390 = vst [vmem:[%s279 + $0x18] sm:$0xff] %v1019
        %1391 = vst [vmem:[%s279 + $0x20] sm:$0xff] %v1023
        %1392 = vst [vmem:[%s279 + $0x28] sm:$0xff] %v1025
        %1393 = vst [vmem:[%s279 + $0x30] sm:$0xff] %v1029
        %1394 = vst [vmem:[%s279 + $0x38] sm:$0xff] %v1031
        %1395 = vst [vmem:[%s279 + $0x40] sm:$0xff] %v1035
        %1396 = vst [vmem:[%s279 + $0x48] sm:$0xff] %v1037
        %1397 = vst [vmem:[%s279 + $0x50] sm:$0xff] %v1041
        %1398 = vst [vmem:[%s279 + $0x58] sm:$0xff] %v1043
        %1399 = vst [vmem:[%s279 + $0x60] sm:$0xff] %v1047
        %1400 = vst [vmem:[%s279 + $0x68] sm:$0xff] %v1049
        %1401 = vst [vmem:[%s279 + $0x70] sm:$0xff] %v1053
        %1402 = vst [vmem:[%s279 + $0x78] sm:$0xff] %v1055
        %1403 = vst [vmem:[%s279 + $0x80] sm:$0xff] %v1059
        %1404 = vst [vmem:[%s279 + $0x88] sm:$0xff] %v1061
        %1405 = vst [vmem:[%s279 + $0x90] sm:$0xff] %v1065
        %1406 = vst [vmem:[%s279 + $0x98] sm:$0xff] %v1067
        %1407 = vst [vmem:[%s279 + $0xa0] sm:$0xff] %v1071
        %1408 = vst [vmem:[%s279 + $0xa8] sm:$0xff] %v1073
        %1409 = vst [vmem:[%s279 + $0xb0] sm:$0xff] %v1077
        %1410 = vst [vmem:[%s279 + $0xb8] sm:$0xff] %v1079
        %1411 = vst [vmem:[%s279 + $0xc0] sm:$0xff] %v1083
        %1412 = vst [vmem:[%s279 + $0xc8] sm:$0xff] %v1085
        %1413 = vst [vmem:[%s279 + $0xd0] sm:$0xff] %v1089
        %1414 = vst [vmem:[%s279 + $0xd8] sm:$0xff] %v1091
        %1415 = vst [vmem:[%s279 + $0xe0] sm:$0xff] %v1095
        %1416 = vst [vmem:[%s279 + $0xe8] sm:$0xff] %v1097
        %1417 = vst [vmem:[%s279 + $0xf0] sm:$0xff] %v1101
        %1418 = vst [vmem:[%s279 + $0xf8] sm:$0xff] %v1103
        %1419 = vst [vmem:[%s279 + $0x100] sm:$0xff] %v1107
        %1420 = vst [vmem:[%s279 + $0x108] sm:$0xff] %v1109
        %1421 = vst [vmem:[%s279 + $0x110] sm:$0xff] %v1113
        %1422 = vst [vmem:[%s279 + $0x118] sm:$0xff] %v1115
        %1423 = vst [vmem:[%s279 + $0x120] sm:$0xff] %v1119
        %1424 = vst [vmem:[%s279 + $0x128] sm:$0xff] %v1121
        %1425 = vst [vmem:[%s279 + $0x130] sm:$0xff] %v1125
        %1426 = vst [vmem:[%s279 + $0x138] sm:$0xff] %v1127
        %1427 = vst [vmem:[%s279 + $0x140] sm:$0xff] %v1131
        %1428 = vst [vmem:[%s279 + $0x148] sm:$0xff] %v1133
        %1429 = vst [vmem:[%s279 + $0x150] sm:$0xff] %v1137
        %1430 = vst [vmem:[%s279 + $0x158] sm:$0xff] %v1139
        %1431 = vst [vmem:[%s279 + $0x160] sm:$0xff] %v1143
        %1432 = vst [vmem:[%s279 + $0x168] sm:$0xff] %v1145
        %1433 = vst [vmem:[%s279 + $0x170] sm:$0xff] %v1149
        %1434 = vst [vmem:[%s279 + $0x178] sm:$0xff] %v1151
        %1435 = vst [vmem:[%s279 + $0x180] sm:$0xff] %v1155
        %1436 = vst [vmem:[%s279 + $0x188] sm:$0xff] %v1157
        %1437 = vst [vmem:[%s279 + $0x190] sm:$0xff] %v1161
        %1438 = vst [vmem:[%s279 + $0x198] sm:$0xff] %v1163
        %1439 = vst [vmem:[%s279 + $0x1a0] sm:$0xff] %v1167
        %1440 = vst [vmem:[%s279 + $0x1a8] sm:$0xff] %v1169
        %1441 = vst [vmem:[%s279 + $0x1b0] sm:$0xff] %v1173
        %1442 = vst [vmem:[%s279 + $0x1b8] sm:$0xff] %v1175
        %1443 = vst [vmem:[%s279 + $0x1c0] sm:$0xff] %v1179
        %1444 = vst [vmem:[%s279 + $0x1c8] sm:$0xff] %v1181
        %1445 = vst [vmem:[%s279 + $0x1d0] sm:$0xff] %v1185
        %1446 = vst [vmem:[%s279 + $0x1d8] sm:$0xff] %v1187
        %1447 = vst [vmem:[%s279 + $0x1e0] sm:$0xff] %v1191
        %1448 = vst [vmem:[%s279 + $0x1e8] sm:$0xff] %v1193
        %1449 = vst [vmem:[%s279 + $0x1f0] sm:$0xff] %v1197
        %1450 = vst [vmem:[%s279 + $0x1f8] sm:$0xff] %v1199
        %1451 = vst [vmem:[%s279 + $0x200] sm:$0xff] %v1203
        %1452 = vst [vmem:[%s279 + $0x208] sm:$0xff] %v1205
        %1453 = vst [vmem:[%s279 + $0x210] sm:$0xff] %v1209
        %1454 = vst [vmem:[%s279 + $0x218] sm:$0xff] %v1211
        %1455 = vst [vmem:[%s279 + $0x220] sm:$0xff] %v1215
        %1456 = vst [vmem:[%s279 + $0x228] sm:$0xff] %v1217
        %1457 = vst [vmem:[%s279 + $0x230] sm:$0xff] %v1221
        %1458 = vst [vmem:[%s279 + $0x238] sm:$0xff] %v1223
        %1459 = vst [vmem:[%s279 + $0x240] sm:$0xff] %v1227
        %1460 = vst [vmem:[%s279 + $0x248] sm:$0xff] %v1229
        %1461 = vst [vmem:[%s279 + $0x250] sm:$0xff] %v1233
        %1462 = vst [vmem:[%s279 + $0x258] sm:$0xff] %v1235
        %1463 = vst [vmem:[%s279 + $0x260] sm:$0xff] %v1239
        %1464 = vst [vmem:[%s279 + $0x268] sm:$0xff] %v1241
        %1465 = vst [vmem:[%s279 + $0x270] sm:$0xff] %v1245
        %1466 = vst [vmem:[%s279 + $0x278] sm:$0xff] %v1247
        %1467 = vst [vmem:[%s279 + $0x280] sm:$0xff] %v1251
        %1468 = vst [vmem:[%s279 + $0x288] sm:$0xff] %v1253
        %1469 = vst [vmem:[%s279 + $0x290] sm:$0xff] %v1257
        %1470 = vst [vmem:[%s279 + $0x298] sm:$0xff] %v1259
        %1471 = vst [vmem:[%s279 + $0x2a0] sm:$0xff] %v1263
        %1472 = vst [vmem:[%s279 + $0x2a8] sm:$0xff] %v1265
        %1473 = vst [vmem:[%s279 + $0x2b0] sm:$0xff] %v1269
        %1474 = vst [vmem:[%s279 + $0x2b8] sm:$0xff] %v1271
        %1475 = vst [vmem:[%s279 + $0x2c0] sm:$0xff] %v1275
        %1476 = vst [vmem:[%s279 + $0x2c8] sm:$0xff] %v1277
        %1477 = vst [vmem:[%s279 + $0x2d0] sm:$0xff] %v1281
        %1478 = vst [vmem:[%s279 + $0x2d8] sm:$0xff] %v1283
        %1479 = vst [vmem:[%s279 + $0x2e0] sm:$0xff] %v1287
        %1480 = vst [vmem:[%s279 + $0x2e8] sm:$0xff] %v1289
        %1481 = vst [vmem:[%s279 + $0x2f0] sm:$0xff] %v1293
        %1482 = vst [vmem:[%s279 + $0x2f8] sm:$0xff] %v1295
        %1483 = vst [vmem:[%s279 + $0x300] sm:$0xff] %v1299
        %1484 = vst [vmem:[%s279 + $0x308] sm:$0xff] %v1301
        %1485 = vst [vmem:[%s279 + $0x310] sm:$0xff] %v1305
        %1486 = vst [vmem:[%s279 + $0x318] sm:$0xff] %v1307
        %1487 = vst [vmem:[%s279 + $0x320] sm:$0xff] %v1311
        %1488 = vst [vmem:[%s279 + $0x328] sm:$0xff] %v1313
        %1489 = vst [vmem:[%s279 + $0x330] sm:$0xff] %v1317
        %1490 = vst [vmem:[%s279 + $0x338] sm:$0xff] %v1319
        %1491 = vst [vmem:[%s279 + $0x340] sm:$0xff] %v1323
        %1492 = vst [vmem:[%s279 + $0x348] sm:$0xff] %v1325
        %1493 = vst [vmem:[%s279 + $0x350] sm:$0xff] %v1329
        %1494 = vst [vmem:[%s279 + $0x358] sm:$0xff] %v1331
        %1495 = vst [vmem:[%s279 + $0x360] sm:$0xff] %v1335
        %1496 = vst [vmem:[%s279 + $0x368] sm:$0xff] %v1337
        %1497 = vst [vmem:[%s279 + $0x370] sm:$0xff] %v1341
        %1498 = vst [vmem:[%s279 + $0x378] sm:$0xff] %v1343
        %1499 = vst [vmem:[%s279 + $0x380] sm:$0xff] %v1347
        %1500 = vst [vmem:[%s279 + $0x388] sm:$0xff] %v1349
        %1501 = vst [vmem:[%s279 + $0x390] sm:$0xff] %v1353
        %1502 = vst [vmem:[%s279 + $0x398] sm:$0xff] %v1355
        %1503 = vst [vmem:[%s279 + $0x3a0] sm:$0xff] %v1359
        %1504 = vst [vmem:[%s279 + $0x3a8] sm:$0xff] %v1361
        %1505 = vst [vmem:[%s279 + $0x3b0] sm:$0xff] %v1365
        %1506 = vst [vmem:[%s279 + $0x3b8] sm:$0xff] %v1367
        %1507 = vst [vmem:[%s279 + $0x3c0] sm:$0xff] %v1371
        %1508 = vst [vmem:[%s279 + $0x3c8] sm:$0xff] %v1373
        %1509 = vst [vmem:[%s279 + $0x3d0] sm:$0xff] %v1377
        %1510 = vst [vmem:[%s279 + $0x3d8] sm:$0xff] %v1379
        %1511 = vst [vmem:[%s279 + $0x3e0] sm:$0xff] %v1383
        %1512 = vst [vmem:[%s279 + $0x3e8] sm:$0xff] %v1385
        %s1513 = sand.u32 %s141, 1
        %s1514 = scalar_lea.sflag [#allocation4], %s1513
        %s1515 = sand.u32 %s141, 1
        %s1516 = smul.addr %s1515, 1008
        %s1517 = scalar_lea.vmem [#allocation8], %s1516
        // Predicated region
        $region53: #{numerical_autoencoder.1} parent=39 // pred_check
          %p1518 = pneg %p151
        $region54: #{numerical_autoencoder.1} parent=39 // pred_check_branch
          %1520 = sbr.rel (%p1518) target = $region56
        $region55: #{numerical_autoencoder.1} parent=39 // pred_region
          %s1521 = smul.u32 63, %s23
          %s1522 = ssub.s32 125, %s1521
          %p1523 = scmp.lt.s32.totalorder %s1522, 63
          %s1524 = scalar_select %p1523, %s1522, 63
          %s1525 = smul.u32 128, %s1524
          %s1526 = smul.u32 %s1525, 2
          %s1528 = ssub.s32 16128, %s1526
          %1529 = vsyncadd %s1514, %s1528
          %p1530 = scmp.ne.s32.totalorder 0, %s1526
          %s1531 = smul.addr %s1521, 2
          %s1532 = smul.addr %s1531, 128
          %s1533 = scalar_lea.hbm %s5, %s1532
          %s1534 = smul.u32 16, %s1524
          %s1535 = sshll.u32 %s1517, 4
          %s1536 = int_to_ptr.vmem [resolvable:$true] %s1535
          %s1537 = sshll.u32 %s1534, 4
          %1541 = dma.vmem_to_hbm [thread:$0]  (%p1530), %s1536, %s1537, %s1533, %s1514, 256, 256, 16
        $region56: #{numerical_autoencoder.1} parent=39 // pred_fallthru
          _
      $region40: #{numerical_autoencoder.1} parent=5 // pred_fallthru
        _
      %p1542 = scmp.le.s32.totalorder 2, %s18
      // Predicated region
      $region57: #{numerical_autoencoder.1} parent=5 // pred_check
        %p1543 = pneg %p1542
      $region58: #{numerical_autoencoder.1} parent=5 // pred_check_branch
        %1545 = sbr.rel (%p1543) target = $region60
      $region59: #{numerical_autoencoder.1} parent=5 // pred_region
        %s1546 = ssub.s32 %s18, 2
        // Predicated region
        $region61: #{numerical_autoencoder.1} parent=59 // pred_check
          %p1547 = pneg %p157
        $region62: #{numerical_autoencoder.1} parent=59 // pred_check_branch
          %1549 = sbr.rel (%p1547) target = $region64
        $region63: #{numerical_autoencoder.1} parent=59 // pred_region
          %s1550 = sand.u32 %s142, 1
          %s1551 = scalar_lea.sflag [#allocation4], %s1550
          %s1552 = sand.u32 %s142, 1
          %s1553 = smul.addr %s1552, 1008
          %s1554 = scalar_lea.vmem [#allocation8], %s1553
          %1555 = dma.done %s1551, 16128
        $region64: #{numerical_autoencoder.1} parent=59 // pred_fallthru
          _
      $region60: #{numerical_autoencoder.1} parent=5 // pred_fallthru
        _
    $region6: #{numerical_autoencoder.1} parent=1 // loop_footer
      %s22 = sadd.s32 1, %s18
    $region7: #{numerical_autoencoder.1} parent=1 // loop_footer_branch
      %17 = sbr.rel target = $region3
    $region8: #{numerical_autoencoder.1} parent=1 // loop_exit
      _
    %1556 = vsyncpa [#allocation3], 1
    %s1557 = scalar_lea.sflag [#allocation3], 1
    %1558 = vsyncpa %s1557, 1
    %1559 = vsyncpa [#allocation6], 1
    %1560 = vsyncpa [#allocation4], 1
    %s1561 = scalar_lea.sflag [#allocation4], 1
    %1562 = vsyncpa %s1561, 1

</llo_original>
